<compile_context>
chip_gen: v6e
topology: v6e:2x2x1
jax: 0.10.0
libtpu: 0.0.40
codegen_flags: <defaults>
</compile_context>

<pallas_src>
import math

import jax
import jax.numpy as jnp
from jax.experimental import pallas as pl
from jax.experimental.pallas import tpu as pltpu


def dab_forward(ifreq, rgb, params):
    """DAB forward. ifreq, rgb: (B, C, H, W) f32 -> (B, C, H, W) f32."""
    B, C, H, W = ifreq.shape
    P = H * W
    CR = params["w_du1"].shape[1]          # reduced channels of conv_du
    eps = 1e-5

    # ---------------- one-time weight prep (wrapper side) ----------------
    a = params["bn_gamma"] / jnp.sqrt(params["bn_var"] + eps)
    bnb = params["bn_beta"] - params["bn_mean"] * a

    # 3x3 conv taps (2 in-channels x 3 x 3) with the BN scale folded in, pre-
    # multiplied by per-pixel edge-validity masks, plus a BN-bias row -> (19, P).
    pos = jnp.arange(P, dtype=jnp.int32)
    hpos, wpos = pos // W, pos % W
    ones = jnp.ones((P,), jnp.float32)
    row_valid = jnp.stack([(hpos >= 1).astype(jnp.float32), ones,
                           (hpos <= H - 2).astype(jnp.float32)])        # (3, P)
    col_valid = jnp.stack([(wpos >= 1).astype(jnp.float32), ones,
                           (wpos <= W - 2).astype(jnp.float32)])        # (3, P)
    mask9 = row_valid[:, None, :] * col_valid[None, :, :]               # (3, 3, P)
    taps = params["w_sa"][0] * a                                        # (2, 3, 3)
    tapmask = (taps[:, :, :, None] * mask9[None]).reshape(18, P)
    tapmask = jnp.concatenate(
        [tapmask, jnp.full((1, P), bnb, jnp.float32)], axis=0)          # (19, P)
    tapmask = tapmask.astype(jnp.float32)

    # 1x1 convs stored (out, in) so the kernel computes weight @ act(C, P); bf16 MXU.
    w_c1, w_c3 = params["w_c1"], params["w_c3"]
    wc1_sa = jnp.transpose(w_c1[:C]).astype(jnp.bfloat16)               # (C, C)
    wc1_ca = jnp.transpose(w_c1[C:]).astype(jnp.bfloat16)
    wc3_rgb = jnp.transpose(w_c3[:C]).astype(jnp.bfloat16)
    wc3_attn = jnp.transpose(w_c3[C:]).astype(jnp.bfloat16)
    b_c1 = params["b_c1"].reshape(C, 1).astype(jnp.float32)
    b_c3 = params["b_c3"].reshape(C, 1).astype(jnp.float32)
    # CA squeeze-excite MLP, (out, in) orientation; tiny, kept f32 for accuracy.
    w_du1t = jnp.transpose(params["w_du1"]).astype(jnp.float32)         # (CR, C)
    b_du1 = params["b_du1"].reshape(CR, 1).astype(jnp.float32)
    w_du2t = jnp.transpose(params["w_du2"]).astype(jnp.float32)         # (C, CR)
    b_du2 = params["b_du2"].reshape(C, 1).astype(jnp.float32)

    # NCHW-flat layout: pure reshapes, no HBM transpose passes.
    ifreq_cp = ifreq.reshape(B, C, P)
    rgb_cp = rgb.reshape(B, C, P)

    def kernel(ifreq_ref, rgb_ref, tm_ref, wdu1_ref, bdu1_ref, wdu2_ref,
               bdu2_ref, wc1sa_ref, wc1ca_ref, bc1_ref, wc3rgb_ref,
               wc3attn_ref, bc3_ref, out_ref):
        x = ifreq_ref[0]                                     # (C, P) f32
        r = rgb_ref[0]                                       # (C, P) f32

        # ---------------- spatial attention (SA) branch ----------------
        cmax = jnp.max(x, axis=0, keepdims=True)             # (1, P)
        cmean = jnp.sum(x, axis=0, keepdims=True) * (1.0 / C)

        # 3x3 conv (2 -> 1 ch, padding=1): lane-axis rolls (XLU) * (tap x mask)
        # rows; BN scale folded into the taps, BN bias is the last table row.
        acc = tm_ref[18:19, :]                               # (1, P) bias row
        for c, cmap in enumerate((cmax, cmean)):
            for kh in range(3):
                for kw in range(3):
                    s = (kh - 1) * W + (kw - 1)
                    shifted = cmap if s == 0 else pltpu.roll(
                        cmap, shift=(-s) % P, axis=1)
                    idx = c * 9 + kh * 3 + kw
                    acc = acc + shifted * tm_ref[idx:idx + 1, :]
        sa_scale = pl.reciprocal(1.0 + jnp.exp(-acc), approx=True)   # (1, P)
        sa_branch = x * sa_scale                              # (C, P)

        # ---------------- channel attention (CA) branch ----------------
        pooled = jnp.sum(x, axis=1, keepdims=True) * (1.0 / P)        # (C, 1)
        h1 = jnp.maximum(
            jnp.dot(wdu1_ref[...], pooled,
                    preferred_element_type=jnp.float32) + bdu1_ref[...], 0.0)
        ca_logit = (jnp.dot(wdu2_ref[...], h1,
                            preferred_element_type=jnp.float32) + bdu2_ref[...])
        ca_w = pl.reciprocal(1.0 + jnp.exp(-ca_logit), approx=True)   # (C, 1)
        ca_branch = x * ca_w                                  # (C, P)

        # ----- fused 1x1 convs: channel concats folded into split matmuls -----
        attn = (jnp.dot(wc1sa_ref[...], sa_branch.astype(jnp.bfloat16),
                        preferred_element_type=jnp.float32)
                + jnp.dot(wc1ca_ref[...], ca_branch.astype(jnp.bfloat16),
                          preferred_element_type=jnp.float32)
                + bc1_ref[...])                               # (C, P)
        out = (jnp.dot(wc3rgb_ref[...], r.astype(jnp.bfloat16),
                       preferred_element_type=jnp.float32)
               + jnp.dot(wc3attn_ref[...], attn.astype(jnp.bfloat16),
                         preferred_element_type=jnp.float32)
               + bc3_ref[...])                                # (C, P)
        out_ref[0] = out.astype(out_ref.dtype)

    grid_spec = pltpu.PrefetchScalarGridSpec(
        num_scalar_prefetch=0,
        grid=(B,),
        in_specs=[
            pl.BlockSpec((1, C, P), lambda b: (b, 0, 0)),    # ifreq (NCHW-flat)
            pl.BlockSpec((1, C, P), lambda b: (b, 0, 0)),    # rgb   (NCHW-flat)
            pl.BlockSpec((19, P), lambda b: (0, 0)),         # tap*mask table + BN bias
            pl.BlockSpec((CR, C), lambda b: (0, 0)),         # conv_du w1^T
            pl.BlockSpec((CR, 1), lambda b: (0, 0)),         # conv_du b1
            pl.BlockSpec((C, CR), lambda b: (0, 0)),         # conv_du w2^T
            pl.BlockSpec((C, 1), lambda b: (0, 0)),          # conv_du b2
            pl.BlockSpec((C, C), lambda b: (0, 0)),          # conv1x1_1 (sa half)
            pl.BlockSpec((C, C), lambda b: (0, 0)),          # conv1x1_1 (ca half)
            pl.BlockSpec((C, 1), lambda b: (0, 0)),          # conv1x1_1 bias
            pl.BlockSpec((C, C), lambda b: (0, 0)),          # conv1x1_3 (rgb half)
            pl.BlockSpec((C, C), lambda b: (0, 0)),          # conv1x1_3 (attn half)
            pl.BlockSpec((C, 1), lambda b: (0, 0)),          # conv1x1_3 bias
        ],
        out_specs=pl.BlockSpec((1, C, P), lambda b: (b, 0, 0)),
    )

    out_cp = pl.pallas_call(
        kernel,
        out_shape=jax.ShapeDtypeStruct((B, C, P), jnp.float32),
        grid_spec=grid_spec,
        compiler_params=pltpu.CompilerParams(
            dimension_semantics=("parallel",)),
    )(ifreq_cp, rgb_cp, tapmask, w_du1t, b_du1, w_du2t, b_du2,
      wc1_sa, wc1_ca, b_c1, wc3_rgb, wc3_attn, b_c3)

    return out_cp.reshape(B, C, H, W)


def dab_reference(ifreq, rgb, params):
    """Pure-JAX reference of DAB.forward (dab_modules='sa-ca', topk_rate=1.0, no act)."""
    eps = 1e-5
    # spatial attention
    cmax = jnp.max(ifreq, axis=1, keepdims=True)
    cmean = jnp.mean(ifreq, axis=1, keepdims=True)
    comp = jnp.concatenate([cmax, cmean], axis=1)                   # (B,2,H,W)
    conv = jax.lax.conv_general_dilated(
        comp, params["w_sa"], window_strides=(1, 1),
        padding=((1, 1), (1, 1)), dimension_numbers=("NCHW", "OIHW", "NCHW"))
    a = params["bn_gamma"] / jnp.sqrt(params["bn_var"] + eps)
    bnb = params["bn_beta"] - params["bn_mean"] * a
    sa = ifreq * jax.nn.sigmoid(conv * a + bnb)
    # channel attention (topk_rate=1.0 -> topk/sort/gather is the identity)
    pooled = jnp.mean(ifreq, axis=(2, 3))                           # (B, C)
    h1 = jax.nn.relu(pooled @ params["w_du1"] + params["b_du1"])
    ca_w = jax.nn.sigmoid(h1 @ params["w_du2"] + params["b_du2"])
    ca = ifreq * ca_w[:, :, None, None]
    # conv1x1_1 on cat([sa, ca]) and conv1x1_3 on cat([rgb, attn])
    attn_cat = jnp.concatenate([sa, ca], axis=1)
    attn = (jnp.einsum("bihw,io->bohw", attn_cat, params["w_c1"])
            + params["b_c1"][None, :, None, None])
    res = jnp.concatenate([rgb, attn], axis=1)
    out = (jnp.einsum("bihw,io->bohw", res, params["w_c3"])
           + params["b_c3"][None, :, None, None])
    return out


if __name__ == "__main__":
    # Small, module-consistent shapes: B=2, n_feat=32, 16x16 spatial, reduction=16.
    B, C, H, W = 2, 32, 16, 16
    reduction = 16
    CR = C // reduction

    key = jax.random.PRNGKey(0)
    ks = jax.random.split(key, 11)

    def u(k, shape, fan_in):
        lim = 1.0 / math.sqrt(fan_in)
        return jax.random.uniform(k, shape, jnp.float32, -lim, lim)

    ifreq = jax.random.normal(ks[0], (B, C, H, W), jnp.float32)
    rgb = jax.random.normal(ks[1], (B, C, H, W), jnp.float32)

    params = {
        # spatial_attn_layer: BasicConv(2, 1, k=3, bias=False) + BatchNorm2d(1) (eval)
        "w_sa": u(ks[2], (1, 2, 3, 3), 2 * 9),
        "bn_gamma": jnp.float32(1.2), "bn_beta": jnp.float32(0.1),
        "bn_mean": jnp.float32(0.05), "bn_var": jnp.float32(0.8),
        # CALayer.conv_du: Conv2d(C, C//r, 1) -> ReLU -> Conv2d(C//r, C, 1) -> Sigmoid
        "w_du1": u(ks[3], (C, CR), C), "b_du1": u(ks[4], (CR,), C),
        "w_du2": u(ks[5], (CR, C), CR), "b_du2": u(ks[6], (C,), CR),
        # conv1x1_1 (2C -> C) and conv1x1_3 (2C -> C), stored as (in, out) matrices
        "w_c1": u(ks[7], (2 * C, C), 2 * C), "b_c1": u(ks[8], (C,), 2 * C),
        "w_c3": u(ks[9], (2 * C, C), 2 * C), "b_c3": u(ks[10], (C,), 2 * C),
    }

    out = dab_forward(ifreq, rgb, params)
    out = jax.block_until_ready(out)

    ref = dab_reference(ifreq, rgb, params)
    assert out.shape == (B, C, H, W)
    # bf16 MXU matmuls (f32 accumulation) + approx-reciprocal sigmoid -> loose tol
    assert jnp.allclose(out, ref, atol=3e-2, rtol=3e-2), float(
        jnp.max(jnp.abs(out - ref)))

    print("KERNEL_OK")
</pallas_src>

<mosaic_0001>
module attributes {stable_mosaic.version = 11 : i64} {
  func.func @kernel(%arg0: i32, %arg1: memref<1x32x256xf32, #tpu.memory_space<vmem>>, %arg2: memref<1x32x256xf32, #tpu.memory_space<vmem>>, %arg3: memref<19x256xf32, #tpu.memory_space<vmem>>, %arg4: memref<2x32xf32, #tpu.memory_space<vmem>>, %arg5: memref<2x1xf32, #tpu.memory_space<vmem>>, %arg6: memref<32x2xf32, #tpu.memory_space<vmem>>, %arg7: memref<32x1xf32, #tpu.memory_space<vmem>>, %arg8: memref<32x32xbf16, #tpu.memory_space<vmem>>, %arg9: memref<32x32xbf16, #tpu.memory_space<vmem>>, %arg10: memref<32x1xf32, #tpu.memory_space<vmem>>, %arg11: memref<32x32xbf16, #tpu.memory_space<vmem>>, %arg12: memref<32x32xbf16, #tpu.memory_space<vmem>>, %arg13: memref<32x1xf32, #tpu.memory_space<vmem>>, %arg14: memref<1x32x256xf32, #tpu.memory_space<vmem>>) attributes {dimension_semantics = [#tpu.dimension_semantics<parallel>], iteration_bounds = array<i64: 2>, scalar_prefetch = 0 : i64, scratch_operands = 0 : i64, tpu.core_type = #tpu.core_type<tc>, window_params = [{transform_indices = @transform_0, window_bounds = array<i64: 1, 32, 256>}, {transform_indices = @transform_1, window_bounds = array<i64: 1, 32, 256>}, {pipeline_mode = #tpu.pipeline_mode<synchronous>, transform_indices = @transform_2, window_bounds = array<i64: 19, 256>}, {pipeline_mode = #tpu.pipeline_mode<synchronous>, transform_indices = @transform_3, window_bounds = array<i64: 2, 32>}, {pipeline_mode = #tpu.pipeline_mode<synchronous>, transform_indices = @transform_4, window_bounds = array<i64: 2, 1>}, {pipeline_mode = #tpu.pipeline_mode<synchronous>, transform_indices = @transform_5, window_bounds = array<i64: 32, 2>}, {pipeline_mode = #tpu.pipeline_mode<synchronous>, transform_indices = @transform_6, window_bounds = array<i64: 32, 1>}, {pipeline_mode = #tpu.pipeline_mode<synchronous>, transform_indices = @transform_7, window_bounds = array<i64: 32, 32>}, {pipeline_mode = #tpu.pipeline_mode<synchronous>, transform_indices = @transform_8, window_bounds = array<i64: 32, 32>}, {pipeline_mode = #tpu.pipeline_mode<synchronous>, transform_indices = @transform_9, window_bounds = array<i64: 32, 1>}, {pipeline_mode = #tpu.pipeline_mode<synchronous>, transform_indices = @transform_10, window_bounds = array<i64: 32, 32>}, {pipeline_mode = #tpu.pipeline_mode<synchronous>, transform_indices = @transform_11, window_bounds = array<i64: 32, 32>}, {pipeline_mode = #tpu.pipeline_mode<synchronous>, transform_indices = @transform_12, window_bounds = array<i64: 32, 1>}, {transform_indices = @transform_13, window_bounds = array<i64: 1, 32, 256>}]} {
    %c0 = arith.constant 0 : index
    %c0_0 = arith.constant 0 : index
    %c0_1 = arith.constant 0 : index
    %0 = vector.load %arg1[%c0, %c0_0, %c0_1] : memref<1x32x256xf32, #tpu.memory_space<vmem>>, vector<1x32x256xf32>
    %1 = vector.shape_cast %0 : vector<1x32x256xf32> to vector<32x256xf32>
    %c0_2 = arith.constant 0 : index
    %c0_3 = arith.constant 0 : index
    %c0_4 = arith.constant 0 : index
    %2 = vector.load %arg2[%c0_2, %c0_3, %c0_4] : memref<1x32x256xf32, #tpu.memory_space<vmem>>, vector<1x32x256xf32>
    %3 = vector.shape_cast %2 : vector<1x32x256xf32> to vector<32x256xf32>
    %cst = arith.constant dense<0xFF800000> : vector<256xf32>
    %4 = vector.multi_reduction <maximumf>, %1, %cst [0] : vector<32x256xf32> to vector<256xf32>
    %5 = vector.shape_cast %4 : vector<256xf32> to vector<1x256xf32>
    %cst_5 = arith.constant dense<0.000000e+00> : vector<256xf32>
    %6 = vector.multi_reduction <add>, %1, %cst_5 [0] : vector<32x256xf32> to vector<256xf32>
    %7 = vector.shape_cast %6 : vector<256xf32> to vector<1x256xf32>
    %cst_6 = arith.constant 3.125000e-02 : f32
    %8 = vector.broadcast %cst_6 : f32 to vector<1x256xf32>
    %9 = arith.mulf %7, %8 : vector<1x256xf32>
    %c18 = arith.constant 18 : index
    %c0_7 = arith.constant 0 : index
    %10 = vector.load %arg3[%c18, %c0_7] : memref<19x256xf32, #tpu.memory_space<vmem>>, vector<1x256xf32>
    %c17_i32 = arith.constant 17 : i32
    %11 = tpu.dynamic_rotate %5 by %c17_i32 dim 1 : vector<1x256xf32>, i32 -> vector<1x256xf32>
    %c0_8 = arith.constant 0 : index
    %c0_9 = arith.constant 0 : index
    %12 = vector.load %arg3[%c0_8, %c0_9] : memref<19x256xf32, #tpu.memory_space<vmem>>, vector<1x256xf32>
    %13 = arith.mulf %11, %12 : vector<1x256xf32>
    %14 = arith.addf %10, %13 : vector<1x256xf32>
    %c16_i32 = arith.constant 16 : i32
    %15 = tpu.dynamic_rotate %5 by %c16_i32 dim 1 : vector<1x256xf32>, i32 -> vector<1x256xf32>
    %c1 = arith.constant 1 : index
    %c0_10 = arith.constant 0 : index
    %16 = vector.load %arg3[%c1, %c0_10] : memref<19x256xf32, #tpu.memory_space<vmem>>, vector<1x256xf32>
    %17 = arith.mulf %15, %16 : vector<1x256xf32>
    %18 = arith.addf %14, %17 : vector<1x256xf32>
    %c15_i32 = arith.constant 15 : i32
    %19 = tpu.dynamic_rotate %5 by %c15_i32 dim 1 : vector<1x256xf32>, i32 -> vector<1x256xf32>
    %c2 = arith.constant 2 : index
    %c0_11 = arith.constant 0 : index
    %20 = vector.load %arg3[%c2, %c0_11] : memref<19x256xf32, #tpu.memory_space<vmem>>, vector<1x256xf32>
    %21 = arith.mulf %19, %20 : vector<1x256xf32>
    %22 = arith.addf %18, %21 : vector<1x256xf32>
    %c1_i32 = arith.constant 1 : i32
    %23 = tpu.dynamic_rotate %5 by %c1_i32 dim 1 : vector<1x256xf32>, i32 -> vector<1x256xf32>
    %c3 = arith.constant 3 : index
    %c0_12 = arith.constant 0 : index
    %24 = vector.load %arg3[%c3, %c0_12] : memref<19x256xf32, #tpu.memory_space<vmem>>, vector<1x256xf32>
    %25 = arith.mulf %23, %24 : vector<1x256xf32>
    %26 = arith.addf %22, %25 : vector<1x256xf32>
    %c4 = arith.constant 4 : index
    %c0_13 = arith.constant 0 : index
    %27 = vector.load %arg3[%c4, %c0_13] : memref<19x256xf32, #tpu.memory_space<vmem>>, vector<1x256xf32>
    %28 = arith.mulf %5, %27 : vector<1x256xf32>
    %29 = arith.addf %26, %28 : vector<1x256xf32>
    %c255_i32 = arith.constant 255 : i32
    %30 = tpu.dynamic_rotate %5 by %c255_i32 dim 1 : vector<1x256xf32>, i32 -> vector<1x256xf32>
    %c5 = arith.constant 5 : index
    %c0_14 = arith.constant 0 : index
    %31 = vector.load %arg3[%c5, %c0_14] : memref<19x256xf32, #tpu.memory_space<vmem>>, vector<1x256xf32>
    %32 = arith.mulf %30, %31 : vector<1x256xf32>
    %33 = arith.addf %29, %32 : vector<1x256xf32>
    %c241_i32 = arith.constant 241 : i32
    %34 = tpu.dynamic_rotate %5 by %c241_i32 dim 1 : vector<1x256xf32>, i32 -> vector<1x256xf32>
    %c6 = arith.constant 6 : index
    %c0_15 = arith.constant 0 : index
    %35 = vector.load %arg3[%c6, %c0_15] : memref<19x256xf32, #tpu.memory_space<vmem>>, vector<1x256xf32>
    %36 = arith.mulf %34, %35 : vector<1x256xf32>
    %37 = arith.addf %33, %36 : vector<1x256xf32>
    %c240_i32 = arith.constant 240 : i32
    %38 = tpu.dynamic_rotate %5 by %c240_i32 dim 1 : vector<1x256xf32>, i32 -> vector<1x256xf32>
    %c7 = arith.constant 7 : index
    %c0_16 = arith.constant 0 : index
    %39 = vector.load %arg3[%c7, %c0_16] : memref<19x256xf32, #tpu.memory_space<vmem>>, vector<1x256xf32>
    %40 = arith.mulf %38, %39 : vector<1x256xf32>
    %41 = arith.addf %37, %40 : vector<1x256xf32>
    %c239_i32 = arith.constant 239 : i32
    %42 = tpu.dynamic_rotate %5 by %c239_i32 dim 1 : vector<1x256xf32>, i32 -> vector<1x256xf32>
    %c8 = arith.constant 8 : index
    %c0_17 = arith.constant 0 : index
    %43 = vector.load %arg3[%c8, %c0_17] : memref<19x256xf32, #tpu.memory_space<vmem>>, vector<1x256xf32>
    %44 = arith.mulf %42, %43 : vector<1x256xf32>
    %45 = arith.addf %41, %44 : vector<1x256xf32>
    %c17_i32_18 = arith.constant 17 : i32
    %46 = tpu.dynamic_rotate %9 by %c17_i32_18 dim 1 : vector<1x256xf32>, i32 -> vector<1x256xf32>
    %c9 = arith.constant 9 : index
    %c0_19 = arith.constant 0 : index
    %47 = vector.load %arg3[%c9, %c0_19] : memref<19x256xf32, #tpu.memory_space<vmem>>, vector<1x256xf32>
    %48 = arith.mulf %46, %47 : vector<1x256xf32>
    %49 = arith.addf %45, %48 : vector<1x256xf32>
    %c16_i32_20 = arith.constant 16 : i32
    %50 = tpu.dynamic_rotate %9 by %c16_i32_20 dim 1 : vector<1x256xf32>, i32 -> vector<1x256xf32>
    %c10 = arith.constant 10 : index
    %c0_21 = arith.constant 0 : index
    %51 = vector.load %arg3[%c10, %c0_21] : memref<19x256xf32, #tpu.memory_space<vmem>>, vector<1x256xf32>
    %52 = arith.mulf %50, %51 : vector<1x256xf32>
    %53 = arith.addf %49, %52 : vector<1x256xf32>
    %c15_i32_22 = arith.constant 15 : i32
    %54 = tpu.dynamic_rotate %9 by %c15_i32_22 dim 1 : vector<1x256xf32>, i32 -> vector<1x256xf32>
    %c11 = arith.constant 11 : index
    %c0_23 = arith.constant 0 : index
    %55 = vector.load %arg3[%c11, %c0_23] : memref<19x256xf32, #tpu.memory_space<vmem>>, vector<1x256xf32>
    %56 = arith.mulf %54, %55 : vector<1x256xf32>
    %57 = arith.addf %53, %56 : vector<1x256xf32>
    %c1_i32_24 = arith.constant 1 : i32
    %58 = tpu.dynamic_rotate %9 by %c1_i32_24 dim 1 : vector<1x256xf32>, i32 -> vector<1x256xf32>
    %c12 = arith.constant 12 : index
    %c0_25 = arith.constant 0 : index
    %59 = vector.load %arg3[%c12, %c0_25] : memref<19x256xf32, #tpu.memory_space<vmem>>, vector<1x256xf32>
    %60 = arith.mulf %58, %59 : vector<1x256xf32>
    %61 = arith.addf %57, %60 : vector<1x256xf32>
    %c13 = arith.constant 13 : index
    %c0_26 = arith.constant 0 : index
    %62 = vector.load %arg3[%c13, %c0_26] : memref<19x256xf32, #tpu.memory_space<vmem>>, vector<1x256xf32>
    %63 = arith.mulf %9, %62 : vector<1x256xf32>
    %64 = arith.addf %61, %63 : vector<1x256xf32>
    %c255_i32_27 = arith.constant 255 : i32
    %65 = tpu.dynamic_rotate %9 by %c255_i32_27 dim 1 : vector<1x256xf32>, i32 -> vector<1x256xf32>
    %c14 = arith.constant 14 : index
    %c0_28 = arith.constant 0 : index
    %66 = vector.load %arg3[%c14, %c0_28] : memref<19x256xf32, #tpu.memory_space<vmem>>, vector<1x256xf32>
    %67 = arith.mulf %65, %66 : vector<1x256xf32>
    %68 = arith.addf %64, %67 : vector<1x256xf32>
    %c241_i32_29 = arith.constant 241 : i32
    %69 = tpu.dynamic_rotate %9 by %c241_i32_29 dim 1 : vector<1x256xf32>, i32 -> vector<1x256xf32>
    %c15 = arith.constant 15 : index
    %c0_30 = arith.constant 0 : index
    %70 = vector.load %arg3[%c15, %c0_30] : memref<19x256xf32, #tpu.memory_space<vmem>>, vector<1x256xf32>
    %71 = arith.mulf %69, %70 : vector<1x256xf32>
    %72 = arith.addf %68, %71 : vector<1x256xf32>
    %c240_i32_31 = arith.constant 240 : i32
    %73 = tpu.dynamic_rotate %9 by %c240_i32_31 dim 1 : vector<1x256xf32>, i32 -> vector<1x256xf32>
    %c16 = arith.constant 16 : index
    %c0_32 = arith.constant 0 : index
    %74 = vector.load %arg3[%c16, %c0_32] : memref<19x256xf32, #tpu.memory_space<vmem>>, vector<1x256xf32>
    %75 = arith.mulf %73, %74 : vector<1x256xf32>
    %76 = arith.addf %72, %75 : vector<1x256xf32>
    %c239_i32_33 = arith.constant 239 : i32
    %77 = tpu.dynamic_rotate %9 by %c239_i32_33 dim 1 : vector<1x256xf32>, i32 -> vector<1x256xf32>
    %c17 = arith.constant 17 : index
    %c0_34 = arith.constant 0 : index
    %78 = vector.load %arg3[%c17, %c0_34] : memref<19x256xf32, #tpu.memory_space<vmem>>, vector<1x256xf32>
    %79 = arith.mulf %77, %78 : vector<1x256xf32>
    %80 = arith.addf %76, %79 : vector<1x256xf32>
    %cst_35 = arith.constant 0.000000e+00 : f32
    %81 = vector.broadcast %cst_35 : f32 to vector<1x256xf32>
    %82 = arith.subf %81, %80 : vector<1x256xf32>
    %83 = math.exp %82 : vector<1x256xf32>
    %cst_36 = arith.constant 1.000000e+00 : f32
    %84 = vector.broadcast %cst_36 : f32 to vector<1x256xf32>
    %85 = arith.addf %84, %83 : vector<1x256xf32>
    %86 = tpu.reciprocal %85 {approx = true} : vector<1x256xf32> -> vector<1x256xf32>
    %87 = vector.broadcast %86 : vector<1x256xf32> to vector<32x256xf32>
    %88 = arith.mulf %1, %87 : vector<32x256xf32>
    %cst_37 = arith.constant dense<0.000000e+00> : vector<32xf32>
    %89 = vector.multi_reduction <add>, %1, %cst_37 [1] : vector<32x256xf32> to vector<32xf32>
    %90 = vector.shape_cast %89 : vector<32xf32> to vector<32x1xf32>
    %cst_38 = arith.constant 3.906250e-03 : f32
    %91 = vector.broadcast %cst_38 : f32 to vector<32x1xf32>
    %92 = arith.mulf %90, %91 : vector<32x1xf32>
    %c0_39 = arith.constant 0 : index
    %c0_40 = arith.constant 0 : index
    %93 = vector.load %arg4[%c0_39, %c0_40] : memref<2x32xf32, #tpu.memory_space<vmem>>, vector<2x32xf32>
    %cst_41 = arith.constant dense<0.000000e+00> : vector<2x1xf32>
    %94 = tpu.matmul %93, %92, %cst_41 {dimension_numbers = #tpu.dot_dimension_numbers<[1], [0], [0], [1], [0, 0, 1, 1], [], []>} : vector<2x32xf32>, vector<32x1xf32>, vector<2x1xf32> -> vector<2x1xf32>
    %c0_42 = arith.constant 0 : index
    %c0_43 = arith.constant 0 : index
    %95 = vector.load %arg5[%c0_42, %c0_43] : memref<2x1xf32, #tpu.memory_space<vmem>>, vector<2x1xf32>
    %96 = arith.addf %94, %95 : vector<2x1xf32>
    %cst_44 = arith.constant 0.000000e+00 : f32
    %97 = vector.broadcast %cst_44 : f32 to vector<2x1xf32>
    %98 = arith.maximumf %96, %97 : vector<2x1xf32>
    %c0_45 = arith.constant 0 : index
    %c0_46 = arith.constant 0 : index
    %99 = vector.load %arg6[%c0_45, %c0_46] : memref<32x2xf32, #tpu.memory_space<vmem>>, vector<32x2xf32>
    %cst_47 = arith.constant dense<0.000000e+00> : vector<32x1xf32>
    %100 = tpu.matmul %99, %98, %cst_47 {dimension_numbers = #tpu.dot_dimension_numbers<[1], [0], [0], [1], [0, 0, 1, 1], [], []>} : vector<32x2xf32>, vector<2x1xf32>, vector<32x1xf32> -> vector<32x1xf32>
    %c0_48 = arith.constant 0 : index
    %c0_49 = arith.constant 0 : index
    %101 = vector.load %arg7[%c0_48, %c0_49] : memref<32x1xf32, #tpu.memory_space<vmem>>, vector<32x1xf32>
    %102 = arith.addf %100, %101 : vector<32x1xf32>
    %cst_50 = arith.constant 0.000000e+00 : f32
    %103 = vector.broadcast %cst_50 : f32 to vector<32x1xf32>
    %104 = arith.subf %103, %102 : vector<32x1xf32>
    %105 = math.exp %104 : vector<32x1xf32>
    %cst_51 = arith.constant 1.000000e+00 : f32
    %106 = vector.broadcast %cst_51 : f32 to vector<32x1xf32>
    %107 = arith.addf %106, %105 : vector<32x1xf32>
    %108 = tpu.reciprocal %107 {approx = true} : vector<32x1xf32> -> vector<32x1xf32>
    %109 = vector.broadcast %108 : vector<32x1xf32> to vector<32x256xf32>
    %110 = arith.mulf %1, %109 : vector<32x256xf32>
    %c0_52 = arith.constant 0 : index
    %c0_53 = arith.constant 0 : index
    %111 = vector.load %arg8[%c0_52, %c0_53] : memref<32x32xbf16, #tpu.memory_space<vmem>>, vector<32x32xbf16>
    %112 = arith.truncf %88 : vector<32x256xf32> to vector<32x256xbf16>
    %cst_54 = arith.constant dense<0.000000e+00> : vector<32x256xf32>
    %113 = tpu.matmul %111, %112, %cst_54 {dimension_numbers = #tpu.dot_dimension_numbers<[1], [0], [0], [1], [0, 0, 1, 1], [], []>} : vector<32x32xbf16>, vector<32x256xbf16>, vector<32x256xf32> -> vector<32x256xf32>
    %c0_55 = arith.constant 0 : index
    %c0_56 = arith.constant 0 : index
    %114 = vector.load %arg9[%c0_55, %c0_56] : memref<32x32xbf16, #tpu.memory_space<vmem>>, vector<32x32xbf16>
    %115 = arith.truncf %110 : vector<32x256xf32> to vector<32x256xbf16>
    %cst_57 = arith.constant dense<0.000000e+00> : vector<32x256xf32>
    %116 = tpu.matmul %114, %115, %cst_57 {dimension_numbers = #tpu.dot_dimension_numbers<[1], [0], [0], [1], [0, 0, 1, 1], [], []>} : vector<32x32xbf16>, vector<32x256xbf16>, vector<32x256xf32> -> vector<32x256xf32>
    %117 = arith.addf %113, %116 : vector<32x256xf32>
    %c0_58 = arith.constant 0 : index
    %c0_59 = arith.constant 0 : index
    %118 = vector.load %arg10[%c0_58, %c0_59] : memref<32x1xf32, #tpu.memory_space<vmem>>, vector<32x1xf32>
    %119 = vector.broadcast %118 : vector<32x1xf32> to vector<32x256xf32>
    %120 = arith.addf %117, %119 : vector<32x256xf32>
    %c0_60 = arith.constant 0 : index
    %c0_61 = arith.constant 0 : index
    %121 = vector.load %arg11[%c0_60, %c0_61] : memref<32x32xbf16, #tpu.memory_space<vmem>>, vector<32x32xbf16>
    %122 = arith.truncf %3 : vector<32x256xf32> to vector<32x256xbf16>
    %cst_62 = arith.constant dense<0.000000e+00> : vector<32x256xf32>
    %123 = tpu.matmul %121, %122, %cst_62 {dimension_numbers = #tpu.dot_dimension_numbers<[1], [0], [0], [1], [0, 0, 1, 1], [], []>} : vector<32x32xbf16>, vector<32x256xbf16>, vector<32x256xf32> -> vector<32x256xf32>
    %c0_63 = arith.constant 0 : index
    %c0_64 = arith.constant 0 : index
    %124 = vector.load %arg12[%c0_63, %c0_64] : memref<32x32xbf16, #tpu.memory_space<vmem>>, vector<32x32xbf16>
    %125 = arith.truncf %120 : vector<32x256xf32> to vector<32x256xbf16>
    %cst_65 = arith.constant dense<0.000000e+00> : vector<32x256xf32>
    %126 = tpu.matmul %124, %125, %cst_65 {dimension_numbers = #tpu.dot_dimension_numbers<[1], [0], [0], [1], [0, 0, 1, 1], [], []>} : vector<32x32xbf16>, vector<32x256xbf16>, vector<32x256xf32> -> vector<32x256xf32>
    %127 = arith.addf %123, %126 : vector<32x256xf32>
    %c0_66 = arith.constant 0 : index
    %c0_67 = arith.constant 0 : index
    %128 = vector.load %arg13[%c0_66, %c0_67] : memref<32x1xf32, #tpu.memory_space<vmem>>, vector<32x1xf32>
    %129 = vector.broadcast %128 : vector<32x1xf32> to vector<32x256xf32>
    %130 = arith.addf %127, %129 : vector<32x256xf32>
    %c0_68 = arith.constant 0 : index
    %c0_69 = arith.constant 0 : index
    %c0_70 = arith.constant 0 : index
    %131 = vector.load %arg14[%c0_68, %c0_69, %c0_70] : memref<1x32x256xf32, #tpu.memory_space<vmem>>, vector<1x32x256xf32>
    %132 = vector.shape_cast %131 : vector<1x32x256xf32> to vector<32x256xf32>
    %133 = vector.shape_cast %130 : vector<32x256xf32> to vector<1x32x256xf32>
    tpu.vector_store %arg14[%c0_68, %c0_69, %c0_70], %133 {strides = array<i32>} : memref<1x32x256xf32, #tpu.memory_space<vmem>>, vector<1x32x256xf32>,
    return
  }
  func.func @transform_0(%arg0: i32) -> (i32, i32, i32) {
    %c0_i32 = arith.constant 0 : i32
    %c0_i32_0 = arith.constant 0 : i32
    %c0_i32_1 = arith.constant 0 : i32
    return %arg0, %c0_i32, %c0_i32_0 : i32, i32, i32
  }
  func.func @transform_1(%arg0: i32) -> (i32, i32, i32) {
    %c0_i32 = arith.constant 0 : i32
    %c0_i32_0 = arith.constant 0 : i32
    %c0_i32_1 = arith.constant 0 : i32
    return %arg0, %c0_i32, %c0_i32_0 : i32, i32, i32
  }
  func.func @transform_2(%arg0: i32) -> (i32, i32) {
    %c0_i32 = arith.constant 0 : i32
    %c0_i32_0 = arith.constant 0 : i32
    %c0_i32_1 = arith.constant 0 : i32
    return %c0_i32, %c0_i32_0 : i32, i32
  }
  func.func @transform_3(%arg0: i32) -> (i32, i32) {
    %c0_i32 = arith.constant 0 : i32
    %c0_i32_0 = arith.constant 0 : i32
    %c0_i32_1 = arith.constant 0 : i32
    return %c0_i32, %c0_i32_0 : i32, i32
  }
  func.func @transform_4(%arg0: i32) -> (i32, i32) {
    %c0_i32 = arith.constant 0 : i32
    %c0_i32_0 = arith.constant 0 : i32
    %c0_i32_1 = arith.constant 0 : i32
    return %c0_i32, %c0_i32_0 : i32, i32
  }
  func.func @transform_5(%arg0: i32) -> (i32, i32) {
    %c0_i32 = arith.constant 0 : i32
    %c0_i32_0 = arith.constant 0 : i32
    %c0_i32_1 = arith.constant 0 : i32
    return %c0_i32, %c0_i32_0 : i32, i32
  }
  func.func @transform_6(%arg0: i32) -> (i32, i32) {
    %c0_i32 = arith.constant 0 : i32
    %c0_i32_0 = arith.constant 0 : i32
    %c0_i32_1 = arith.constant 0 : i32
    return %c0_i32, %c0_i32_0 : i32, i32
  }
  func.func @transform_7(%arg0: i32) -> (i32, i32) {
    %c0_i32 = arith.constant 0 : i32
    %c0_i32_0 = arith.constant 0 : i32
    %c0_i32_1 = arith.constant 0 : i32
    return %c0_i32, %c0_i32_0 : i32, i32
  }
  func.func @transform_8(%arg0: i32) -> (i32, i32) {
    %c0_i32 = arith.constant 0 : i32
    %c0_i32_0 = arith.constant 0 : i32
    %c0_i32_1 = arith.constant 0 : i32
    return %c0_i32, %c0_i32_0 : i32, i32
  }
  func.func @transform_9(%arg0: i32) -> (i32, i32) {
    %c0_i32 = arith.constant 0 : i32
    %c0_i32_0 = arith.constant 0 : i32
    %c0_i32_1 = arith.constant 0 : i32
    return %c0_i32, %c0_i32_0 : i32, i32
  }
  func.func @transform_10(%arg0: i32) -> (i32, i32) {
    %c0_i32 = arith.constant 0 : i32
    %c0_i32_0 = arith.constant 0 : i32
    %c0_i32_1 = arith.constant 0 : i32
    return %c0_i32, %c0_i32_0 : i32, i32
  }
  func.func @transform_11(%arg0: i32) -> (i32, i32) {
    %c0_i32 = arith.constant 0 : i32
    %c0_i32_0 = arith.constant 0 : i32
    %c0_i32_1 = arith.constant 0 : i32
    return %c0_i32, %c0_i32_0 : i32, i32
  }
  func.func @transform_12(%arg0: i32) -> (i32, i32) {
    %c0_i32 = arith.constant 0 : i32
    %c0_i32_0 = arith.constant 0 : i32
    %c0_i32_1 = arith.constant 0 : i32
    return %c0_i32, %c0_i32_0 : i32, i32
  }
  func.func @transform_13(%arg0: i32) -> (i32, i32, i32) {
    %c0_i32 = arith.constant 0 : i32
    %c0_i32_0 = arith.constant 0 : i32
    %c0_i32_1 = arith.constant 0 : i32
    return %arg0, %c0_i32, %c0_i32_0 : i32, i32, i32
  }
}

</mosaic_0001>

<llo_original>
// kernel: tpu_custom_call.1
$region0: #{tpu_custom_call.1}
  #allocation0 [shape = 'u32[]', space=smem, size = 0x4, offset = 0x4, fixed_abs, tag = 'smem constant byte address 0x4 - core index']
  #allocation1 [shape = 'u32[144,128]{1,0:T(1,128)}', space=vmem, size = 0x12000, scoped, tag = 'internal scratch']
  %s0 = inlined_call_operand.vmem [shape: f32[2,32,256], index: 0, kind: input, shape index: {}]
  %s1 = inlined_call_operand.hbm [shape: f32[2,32,256], index: 1, kind: input, shape index: {}]
  %s2 = inlined_call_operand.hbm [shape: f32[19,256], index: 2, kind: input, shape index: {}]
  %s3 = inlined_call_operand.hbm [shape: f32[2,32], index: 3, kind: input, shape index: {}]
  %s4 = inlined_call_operand.vmem [shape: f32[2,1], index: 4, kind: input, shape index: {}]
  %s5 = inlined_call_operand.vmem [shape: f32[32,2], index: 5, kind: input, shape index: {}]
  %s6 = inlined_call_operand.vmem [shape: f32[32,1], index: 6, kind: input, shape index: {}]
  %s7 = inlined_call_operand.vmem [shape: bf16[32,32], index: 7, kind: input, shape index: {}]
  %s8 = inlined_call_operand.hbm [shape: bf16[32,32], index: 8, kind: input, shape index: {}]
  %s9 = inlined_call_operand.vmem [shape: f32[32,1], index: 9, kind: input, shape index: {}]
  %s10 = inlined_call_operand.hbm [shape: bf16[32,32], index: 10, kind: input, shape index: {}]
  %s11 = inlined_call_operand.hbm [shape: bf16[32,32], index: 11, kind: input, shape index: {}]
  %s12 = inlined_call_operand.vmem [shape: f32[32,1], index: 12, kind: input, shape index: {}]
  %s13 = inlined_call_operand.hbm [shape: f32[2,32,256], index: 13, kind: output, shape index: {}]
  %s14 = sld [smem:[#allocation0]]
  $region109: #{tpu_custom_call.1} parent=0
    _
  %s16 = ssub.s32 1, %s14
  %s17 = scalar_select 0, %s16, %s14
  $region1: #{tpu_custom_call.1} parent=0
    #allocation2 [shape = 'u8[65536]{0}', space=vmem, size = 0x10000, scoped, tag = 'input window, operand 1']
    #allocation3 [shape = 's32[2]{0}', space=sflag, size = 0x8, scoped, tag = 'scoped memory for tpu_custom_call.1']
    #allocation4 [shape = 's32[2]{0}', space=sflag, size = 0x8, scoped, tag = 'scoped memory for tpu_custom_call.1']
    #allocation5 [shape = 'u8[24576]{0}', space=vmem, size = 0x6000, scoped, tag = 'input window, operand 2, single buffered']
    #allocation6 [shape = 's32[1]{0}', space=sflag, size = 0x4, scoped, tag = 'scoped memory for tpu_custom_call.1']
    #allocation7 [shape = 'u8[1024]{0}', space=vmem, size = 0x400, scoped, tag = 'input window, operand 3, single buffered']
    #allocation8 [shape = 'u8[8192]{0}', space=vmem, size = 0x2000, scoped, tag = 'input window, operand 8, single buffered']
    #allocation9 [shape = 's32[1]{0}', space=sflag, size = 0x4, scoped, tag = 'scoped memory for tpu_custom_call.1']
    #allocation10 [shape = 'u8[8192]{0}', space=vmem, size = 0x2000, scoped, tag = 'input window, operand 10, single buffered']
    #allocation11 [shape = 'u8[8192]{0}', space=vmem, size = 0x2000, scoped, tag = 'input window, operand 11, single buffered']
    #allocation12 [shape = 's32[1]{0}', space=sflag, size = 0x4, scoped, tag = 'scoped memory for tpu_custom_call.1']
    #allocation13 [shape = 'u8[65536]{0}', space=vmem, size = 0x10000, scoped, tag = 'output window, operand 0']
    %18 = vsyncpa [#allocation3], 0
    %s19 = scalar_lea.sflag [#allocation3], 1
    %20 = vsyncpa %s19, 0
    %21 = vsyncpa [#allocation6], 0
    %22 = vsyncpa [#allocation9], 0
    %23 = vsyncpa [#allocation12], 0
    %24 = vsyncpa [#allocation4], 0
    %s25 = scalar_lea.sflag [#allocation4], 1
    %26 = vsyncpa %s25, 0
    loop: start=0, step=1, limit=4
    $region2: #{tpu_custom_call.1} parent=1 // loop_pre_header
      _
    $region3: #{tpu_custom_call.1} parent=1 // loop_header
      %s28 = sphi 0, %s32
      %p29 = scmp.ge.s32.totalorder %s28, 4
      %s38 = sphi 0, %s40
      %s41 = sphi 0, %s38
      %s42 = sphi 0, %s41
      %s58 = sphi 0, %s42
      %s64 = sphi 0, %s66
      %s67 = sphi 0, %s64
      %s68 = sphi 0, %s67
      %s84 = sphi 0, %s68
      %s88 = sphi 0, %s88
      %s90 = sphi 0, %s88
      %s91 = sphi 0, %s90
      %s105 = sphi 0, %s91
      %s109 = sphi 0, %s109
      %s111 = sphi 0, %s109
      %s112 = sphi 0, %s111
      %s126 = sphi 0, %s112
      %s130 = sphi 0, %s130
      %s132 = sphi 0, %s130
      %s133 = sphi 0, %s132
      %s147 = sphi 0, %s133
      %s151 = sphi 0, %s151
      %s153 = sphi 0, %s151
      %s154 = sphi 0, %s153
      %s168 = sphi 0, %s154
      %s172 = sphi 0, %s172
      %s174 = sphi 0, %s172
      %s175 = sphi 0, %s174
      %s189 = sphi 0, %s175
      %s193 = sphi 0, %s193
      %s195 = sphi 0, %s193
      %s196 = sphi 0, %s195
      %s210 = sphi 0, %s196
      %s214 = sphi 0, %s214
      %s216 = sphi 0, %s214
      %s217 = sphi 0, %s216
      %s231 = sphi 0, %s217
      %s235 = sphi 0, %s235
      %s237 = sphi 0, %s235
      %s238 = sphi 0, %s237
      %s252 = sphi 0, %s238
      %s256 = sphi 0, %s256
      %s258 = sphi 0, %s256
      %s259 = sphi 0, %s258
      %s273 = sphi 0, %s259
      %s277 = sphi 0, %s277
      %s279 = sphi 0, %s277
      %s280 = sphi 0, %s279
      %s294 = sphi 0, %s280
      %s298 = sphi 0, %s298
      %s300 = sphi 0, %s298
      %s301 = sphi 0, %s300
      %s315 = sphi 0, %s301
      %s321 = sphi 0, %s323
      %s324 = sphi 0, %s321
      %s325 = sphi 0, %s324
      %s341 = sphi 0, %s325
    $region4: #{tpu_custom_call.1} parent=1 // loop_header_branch
      %31 = sbr.rel (%p29) target = $region8
    $region5: #{tpu_custom_call.1} parent=1 // loop_body
      %s33 = ssub.s32 %s28, 1
      %s34 = ssub.s32 %s28, 2
      %s35 = sadd.s32 %s28, 1
      %s36 = ssub.s32 %s28, %s35
      %p37 = scmp.eq.s32.totalorder %s36, 0
      %s39 = sadd.s32 %s38, 1
      %s40 = scalar_select %p37, %s38, %s39
      %p43 = pneg %p37
      %p44 = scmp.eq.s32.totalorder %s28, 1
      %p45 = por %p43, %p44
      %p46 = scmp.ne.s32.totalorder %s38, %s41
      %p47 = scmp.eq.s32.totalorder %s28, 0
      %p48 = por %p46, %p47
      %p49 = scmp.ne.s32.totalorder %s38, %s41
      %p50 = scmp.eq.s32.totalorder %s33, 1
      %p51 = por %p49, %p50
      %p52 = scmp.ne.s32.totalorder %s41, %s42
      %p53 = scmp.eq.s32.totalorder %s33, 0
      %p54 = por %p52, %p53
      %p55 = scmp.ne.s32.totalorder %s41, %s42
      %p56 = scmp.eq.s32.totalorder %s34, 1
      %p57 = por %p55, %p56
      %p59 = scmp.ne.s32.totalorder %s42, %s58
      %p60 = scmp.eq.s32.totalorder %s34, 0
      %p61 = por %p59, %p60
      %s62 = ssub.s32 %s28, %s35
      %p63 = scmp.eq.s32.totalorder %s62, 0
      %s65 = sadd.s32 %s64, 1
      %s66 = scalar_select %p63, %s64, %s65
      %p69 = pneg %p63
      %p70 = scmp.eq.s32.totalorder %s28, 1
      %p71 = por %p69, %p70
      %p72 = scmp.ne.s32.totalorder %s64, %s67
      %p73 = scmp.eq.s32.totalorder %s28, 0
      %p74 = por %p72, %p73
      %p75 = scmp.ne.s32.totalorder %s64, %s67
      %p76 = scmp.eq.s32.totalorder %s33, 1
      %p77 = por %p75, %p76
      %p78 = scmp.ne.s32.totalorder %s67, %s68
      %p79 = scmp.eq.s32.totalorder %s33, 0
      %p80 = por %p78, %p79
      %p81 = scmp.ne.s32.totalorder %s67, %s68
      %p82 = scmp.eq.s32.totalorder %s34, 1
      %p83 = por %p81, %p82
      %p85 = scmp.ne.s32.totalorder %s68, %s84
      %p86 = scmp.eq.s32.totalorder %s34, 0
      %p87 = por %p85, %p86
      %s89 = sadd.s32 %s88, 1
      %p92 = scmp.eq.s32.totalorder %s28, 1
      %p93 = scmp.ne.s32.totalorder %s88, %s90
      %p94 = scmp.eq.s32.totalorder %s28, 0
      %p95 = por %p93, %p94
      %p96 = scmp.ne.s32.totalorder %s88, %s90
      %p97 = scmp.eq.s32.totalorder %s33, 1
      %p98 = por %p96, %p97
      %p99 = scmp.ne.s32.totalorder %s90, %s91
      %p100 = scmp.eq.s32.totalorder %s33, 0
      %p101 = por %p99, %p100
      %p102 = scmp.ne.s32.totalorder %s90, %s91
      %p103 = scmp.eq.s32.totalorder %s34, 1
      %p104 = por %p102, %p103
      %p106 = scmp.ne.s32.totalorder %s91, %s105
      %p107 = scmp.eq.s32.totalorder %s34, 0
      %p108 = por %p106, %p107
      %s110 = sadd.s32 %s109, 1
      %p113 = scmp.eq.s32.totalorder %s28, 1
      %p114 = scmp.ne.s32.totalorder %s109, %s111
      %p115 = scmp.eq.s32.totalorder %s28, 0
      %p116 = por %p114, %p115
      %p117 = scmp.ne.s32.totalorder %s109, %s111
      %p118 = scmp.eq.s32.totalorder %s33, 1
      %p119 = por %p117, %p118
      %p120 = scmp.ne.s32.totalorder %s111, %s112
      %p121 = scmp.eq.s32.totalorder %s33, 0
      %p122 = por %p120, %p121
      %p123 = scmp.ne.s32.totalorder %s111, %s112
      %p124 = scmp.eq.s32.totalorder %s34, 1
      %p125 = por %p123, %p124
      %p127 = scmp.ne.s32.totalorder %s112, %s126
      %p128 = scmp.eq.s32.totalorder %s34, 0
      %p129 = por %p127, %p128
      %s131 = sadd.s32 %s130, 1
      %p134 = scmp.eq.s32.totalorder %s28, 1
      %p135 = scmp.ne.s32.totalorder %s130, %s132
      %p136 = scmp.eq.s32.totalorder %s28, 0
      %p137 = por %p135, %p136
      %p138 = scmp.ne.s32.totalorder %s130, %s132
      %p139 = scmp.eq.s32.totalorder %s33, 1
      %p140 = por %p138, %p139
      %p141 = scmp.ne.s32.totalorder %s132, %s133
      %p142 = scmp.eq.s32.totalorder %s33, 0
      %p143 = por %p141, %p142
      %p144 = scmp.ne.s32.totalorder %s132, %s133
      %p145 = scmp.eq.s32.totalorder %s34, 1
      %p146 = por %p144, %p145
      %p148 = scmp.ne.s32.totalorder %s133, %s147
      %p149 = scmp.eq.s32.totalorder %s34, 0
      %p150 = por %p148, %p149
      %s152 = sadd.s32 %s151, 1
      %p155 = scmp.eq.s32.totalorder %s28, 1
      %p156 = scmp.ne.s32.totalorder %s151, %s153
      %p157 = scmp.eq.s32.totalorder %s28, 0
      %p158 = por %p156, %p157
      %p159 = scmp.ne.s32.totalorder %s151, %s153
      %p160 = scmp.eq.s32.totalorder %s33, 1
      %p161 = por %p159, %p160
      %p162 = scmp.ne.s32.totalorder %s153, %s154
      %p163 = scmp.eq.s32.totalorder %s33, 0
      %p164 = por %p162, %p163
      %p165 = scmp.ne.s32.totalorder %s153, %s154
      %p166 = scmp.eq.s32.totalorder %s34, 1
      %p167 = por %p165, %p166
      %p169 = scmp.ne.s32.totalorder %s154, %s168
      %p170 = scmp.eq.s32.totalorder %s34, 0
      %p171 = por %p169, %p170
      %s173 = sadd.s32 %s172, 1
      %p176 = scmp.eq.s32.totalorder %s28, 1
      %p177 = scmp.ne.s32.totalorder %s172, %s174
      %p178 = scmp.eq.s32.totalorder %s28, 0
      %p179 = por %p177, %p178
      %p180 = scmp.ne.s32.totalorder %s172, %s174
      %p181 = scmp.eq.s32.totalorder %s33, 1
      %p182 = por %p180, %p181
      %p183 = scmp.ne.s32.totalorder %s174, %s175
      %p184 = scmp.eq.s32.totalorder %s33, 0
      %p185 = por %p183, %p184
      %p186 = scmp.ne.s32.totalorder %s174, %s175
      %p187 = scmp.eq.s32.totalorder %s34, 1
      %p188 = por %p186, %p187
      %p190 = scmp.ne.s32.totalorder %s175, %s189
      %p191 = scmp.eq.s32.totalorder %s34, 0
      %p192 = por %p190, %p191
      %s194 = sadd.s32 %s193, 1
      %p197 = scmp.eq.s32.totalorder %s28, 1
      %p198 = scmp.ne.s32.totalorder %s193, %s195
      %p199 = scmp.eq.s32.totalorder %s28, 0
      %p200 = por %p198, %p199
      %p201 = scmp.ne.s32.totalorder %s193, %s195
      %p202 = scmp.eq.s32.totalorder %s33, 1
      %p203 = por %p201, %p202
      %p204 = scmp.ne.s32.totalorder %s195, %s196
      %p205 = scmp.eq.s32.totalorder %s33, 0
      %p206 = por %p204, %p205
      %p207 = scmp.ne.s32.totalorder %s195, %s196
      %p208 = scmp.eq.s32.totalorder %s34, 1
      %p209 = por %p207, %p208
      %p211 = scmp.ne.s32.totalorder %s196, %s210
      %p212 = scmp.eq.s32.totalorder %s34, 0
      %p213 = por %p211, %p212
      %s215 = sadd.s32 %s214, 1
      %p218 = scmp.eq.s32.totalorder %s28, 1
      %p219 = scmp.ne.s32.totalorder %s214, %s216
      %p220 = scmp.eq.s32.totalorder %s28, 0
      %p221 = por %p219, %p220
      %p222 = scmp.ne.s32.totalorder %s214, %s216
      %p223 = scmp.eq.s32.totalorder %s33, 1
      %p224 = por %p222, %p223
      %p225 = scmp.ne.s32.totalorder %s216, %s217
      %p226 = scmp.eq.s32.totalorder %s33, 0
      %p227 = por %p225, %p226
      %p228 = scmp.ne.s32.totalorder %s216, %s217
      %p229 = scmp.eq.s32.totalorder %s34, 1
      %p230 = por %p228, %p229
      %p232 = scmp.ne.s32.totalorder %s217, %s231
      %p233 = scmp.eq.s32.totalorder %s34, 0
      %p234 = por %p232, %p233
      %s236 = sadd.s32 %s235, 1
      %p239 = scmp.eq.s32.totalorder %s28, 1
      %p240 = scmp.ne.s32.totalorder %s235, %s237
      %p241 = scmp.eq.s32.totalorder %s28, 0
      %p242 = por %p240, %p241
      %p243 = scmp.ne.s32.totalorder %s235, %s237
      %p244 = scmp.eq.s32.totalorder %s33, 1
      %p245 = por %p243, %p244
      %p246 = scmp.ne.s32.totalorder %s237, %s238
      %p247 = scmp.eq.s32.totalorder %s33, 0
      %p248 = por %p246, %p247
      %p249 = scmp.ne.s32.totalorder %s237, %s238
      %p250 = scmp.eq.s32.totalorder %s34, 1
      %p251 = por %p249, %p250
      %p253 = scmp.ne.s32.totalorder %s238, %s252
      %p254 = scmp.eq.s32.totalorder %s34, 0
      %p255 = por %p253, %p254
      %s257 = sadd.s32 %s256, 1
      %p260 = scmp.eq.s32.totalorder %s28, 1
      %p261 = scmp.ne.s32.totalorder %s256, %s258
      %p262 = scmp.eq.s32.totalorder %s28, 0
      %p263 = por %p261, %p262
      %p264 = scmp.ne.s32.totalorder %s256, %s258
      %p265 = scmp.eq.s32.totalorder %s33, 1
      %p266 = por %p264, %p265
      %p267 = scmp.ne.s32.totalorder %s258, %s259
      %p268 = scmp.eq.s32.totalorder %s33, 0
      %p269 = por %p267, %p268
      %p270 = scmp.ne.s32.totalorder %s258, %s259
      %p271 = scmp.eq.s32.totalorder %s34, 1
      %p272 = por %p270, %p271
      %p274 = scmp.ne.s32.totalorder %s259, %s273
      %p275 = scmp.eq.s32.totalorder %s34, 0
      %p276 = por %p274, %p275
      %s278 = sadd.s32 %s277, 1
      %p281 = scmp.eq.s32.totalorder %s28, 1
      %p282 = scmp.ne.s32.totalorder %s277, %s279
      %p283 = scmp.eq.s32.totalorder %s28, 0
      %p284 = por %p282, %p283
      %p285 = scmp.ne.s32.totalorder %s277, %s279
      %p286 = scmp.eq.s32.totalorder %s33, 1
      %p287 = por %p285, %p286
      %p288 = scmp.ne.s32.totalorder %s279, %s280
      %p289 = scmp.eq.s32.totalorder %s33, 0
      %p290 = por %p288, %p289
      %p291 = scmp.ne.s32.totalorder %s279, %s280
      %p292 = scmp.eq.s32.totalorder %s34, 1
      %p293 = por %p291, %p292
      %p295 = scmp.ne.s32.totalorder %s280, %s294
      %p296 = scmp.eq.s32.totalorder %s34, 0
      %p297 = por %p295, %p296
      %s299 = sadd.s32 %s298, 1
      %p302 = scmp.eq.s32.totalorder %s28, 1
      %p303 = scmp.ne.s32.totalorder %s298, %s300
      %p304 = scmp.eq.s32.totalorder %s28, 0
      %p305 = por %p303, %p304
      %p306 = scmp.ne.s32.totalorder %s298, %s300
      %p307 = scmp.eq.s32.totalorder %s33, 1
      %p308 = por %p306, %p307
      %p309 = scmp.ne.s32.totalorder %s300, %s301
      %p310 = scmp.eq.s32.totalorder %s33, 0
      %p311 = por %p309, %p310
      %p312 = scmp.ne.s32.totalorder %s300, %s301
      %p313 = scmp.eq.s32.totalorder %s34, 1
      %p314 = por %p312, %p313
      %p316 = scmp.ne.s32.totalorder %s301, %s315
      %p317 = scmp.eq.s32.totalorder %s34, 0
      %p318 = por %p316, %p317
      %s319 = ssub.s32 %s28, %s35
      %p320 = scmp.eq.s32.totalorder %s319, 0
      %s322 = sadd.s32 %s321, 1
      %s323 = scalar_select %p320, %s321, %s322
      %p326 = pneg %p320
      %p327 = scmp.eq.s32.totalorder %s28, 1
      %p328 = por %p326, %p327
      %p329 = scmp.ne.s32.totalorder %s321, %s324
      %p330 = scmp.eq.s32.totalorder %s28, 0
      %p331 = por %p329, %p330
      %p332 = scmp.ne.s32.totalorder %s321, %s324
      %p333 = scmp.eq.s32.totalorder %s33, 1
      %p334 = por %p332, %p333
      %p335 = scmp.ne.s32.totalorder %s324, %s325
      %p336 = scmp.eq.s32.totalorder %s33, 0
      %p337 = por %p335, %p336
      %p338 = scmp.ne.s32.totalorder %s324, %s325
      %p339 = scmp.eq.s32.totalorder %s34, 1
      %p340 = por %p338, %p339
      %p342 = scmp.ne.s32.totalorder %s325, %s341
      %p343 = scmp.eq.s32.totalorder %s34, 0
      %p344 = por %p342, %p343
      %p345 = scmp.le.s32.totalorder 1, %s28
      %p346 = scmp.lt.s32.totalorder %s28, 3
      %p347 = pnand %p345, %p346
      %p348 = pneg %p347
      // Predicated region
      $region9: #{tpu_custom_call.1} parent=5 // pred_check
        _
      $region10: #{tpu_custom_call.1} parent=5 // pred_check_branch
        %350 = sbr.rel (%p347) target = $region12
      $region11: #{tpu_custom_call.1} parent=5 // pred_region
        %s351 = ssub.s32 %s28, 1
        // Predicated region
        $region13: #{tpu_custom_call.1} parent=11 // pred_check
          %p352 = pneg %p101
        $region14: #{tpu_custom_call.1} parent=11 // pred_check_branch
          %354 = sbr.rel (%p352) target = $region16
        $region15: #{tpu_custom_call.1} parent=11 // pred_region
          %s356 = ssub.s32 768, 768
          %357 = vsyncadd [#allocation6], %s356
          %s358 = sshll.u32 [#allocation5], 4
          %s359 = int_to_ptr.vmem [resolvable:$true] %s358
          %364 = dma.hbm_to_vmem [thread:$0]  %s2, 768, %s359, [#allocation6], 256, 256, 16
        $region16: #{tpu_custom_call.1} parent=11 // pred_fallthru
          _
        // Predicated region
        $region17: #{tpu_custom_call.1} parent=11 // pred_check
          %p365 = pneg %p122
        $region18: #{tpu_custom_call.1} parent=11 // pred_check_branch
          %367 = sbr.rel (%p365) target = $region20
        $region19: #{tpu_custom_call.1} parent=11 // pred_region
          %s369 = ssub.s32 32, 32
          %370 = vsyncadd [#allocation6], %s369
          %s372 = sshll.u32 [#allocation7], 4
          %s373 = int_to_ptr.vmem [resolvable:$true] %s372
          %375 = dma.hbm_to_vmem [thread:$0]  %s3, 32, %s373, [#allocation6]
        $region20: #{tpu_custom_call.1} parent=11 // pred_fallthru
          _
        // Predicated region
        $region21: #{tpu_custom_call.1} parent=11 // pred_check
          %p376 = pneg %p143
        $region22: #{tpu_custom_call.1} parent=11 // pred_check_branch
          %378 = sbr.rel (%p376) target = $region24
        $region23: #{tpu_custom_call.1} parent=11 // pred_region
          _
        $region24: #{tpu_custom_call.1} parent=11 // pred_fallthru
          _
        // Predicated region
        $region25: #{tpu_custom_call.1} parent=11 // pred_check
          %p379 = pneg %p164
        $region26: #{tpu_custom_call.1} parent=11 // pred_check_branch
          %381 = sbr.rel (%p379) target = $region28
        $region27: #{tpu_custom_call.1} parent=11 // pred_region
          _
        $region28: #{tpu_custom_call.1} parent=11 // pred_fallthru
          _
        // Predicated region
        $region29: #{tpu_custom_call.1} parent=11 // pred_check
          %p382 = pneg %p185
        $region30: #{tpu_custom_call.1} parent=11 // pred_check_branch
          %384 = sbr.rel (%p382) target = $region32
        $region31: #{tpu_custom_call.1} parent=11 // pred_region
          _
        $region32: #{tpu_custom_call.1} parent=11 // pred_fallthru
          _
        // Predicated region
        $region33: #{tpu_custom_call.1} parent=11 // pred_check
          %p385 = pneg %p206
        $region34: #{tpu_custom_call.1} parent=11 // pred_check_branch
          %387 = sbr.rel (%p385) target = $region36
        $region35: #{tpu_custom_call.1} parent=11 // pred_region
          _
        $region36: #{tpu_custom_call.1} parent=11 // pred_fallthru
          _
        // Predicated region
        $region37: #{tpu_custom_call.1} parent=11 // pred_check
          %p388 = pneg %p227
        $region38: #{tpu_custom_call.1} parent=11 // pred_check_branch
          %390 = sbr.rel (%p388) target = $region40
        $region39: #{tpu_custom_call.1} parent=11 // pred_region
          %s392 = ssub.s32 256, 256
          %393 = vsyncadd [#allocation9], %s392
          %s394 = sshll.u32 [#allocation8], 4
          %s395 = int_to_ptr.vmem [resolvable:$true] %s394
          %400 = dma.hbm_to_vmem [thread:$0]  %s8, 256, %s395, [#allocation9], 64, 64, 4
        $region40: #{tpu_custom_call.1} parent=11 // pred_fallthru
          _
        // Predicated region
        $region41: #{tpu_custom_call.1} parent=11 // pred_check
          %p401 = pneg %p248
        $region42: #{tpu_custom_call.1} parent=11 // pred_check_branch
          %403 = sbr.rel (%p401) target = $region44
        $region43: #{tpu_custom_call.1} parent=11 // pred_region
          _
        $region44: #{tpu_custom_call.1} parent=11 // pred_fallthru
          _
        // Predicated region
        $region45: #{tpu_custom_call.1} parent=11 // pred_check
          %p404 = pneg %p269
        $region46: #{tpu_custom_call.1} parent=11 // pred_check_branch
          %406 = sbr.rel (%p404) target = $region48
        $region47: #{tpu_custom_call.1} parent=11 // pred_region
          %s408 = ssub.s32 256, 256
          %409 = vsyncadd [#allocation9], %s408
          %s410 = sshll.u32 [#allocation10], 4
          %s411 = int_to_ptr.vmem [resolvable:$true] %s410
          %416 = dma.hbm_to_vmem [thread:$0]  %s10, 256, %s411, [#allocation9], 64, 64, 4
        $region48: #{tpu_custom_call.1} parent=11 // pred_fallthru
          _
        // Predicated region
        $region49: #{tpu_custom_call.1} parent=11 // pred_check
          %p417 = pneg %p290
        $region50: #{tpu_custom_call.1} parent=11 // pred_check_branch
          %419 = sbr.rel (%p417) target = $region52
        $region51: #{tpu_custom_call.1} parent=11 // pred_region
          %s421 = ssub.s32 256, 256
          %422 = vsyncadd [#allocation12], %s421
          %s423 = sshll.u32 [#allocation11], 4
          %s424 = int_to_ptr.vmem [resolvable:$true] %s423
          %429 = dma.hbm_to_vmem [thread:$0]  %s11, 256, %s424, [#allocation12], 64, 64, 4
        $region52: #{tpu_custom_call.1} parent=11 // pred_fallthru
          _
        // Predicated region
        $region53: #{tpu_custom_call.1} parent=11 // pred_check
          %p430 = pneg %p311
        $region54: #{tpu_custom_call.1} parent=11 // pred_check_branch
          %432 = sbr.rel (%p430) target = $region56
        $region55: #{tpu_custom_call.1} parent=11 // pred_region
          _
        $region56: #{tpu_custom_call.1} parent=11 // pred_fallthru
          _
      $region12: #{tpu_custom_call.1} parent=5 // pred_fallthru
        _
      %p433 = scmp.lt.s32.totalorder %s28, 2
      // Predicated region
      $region57: #{tpu_custom_call.1} parent=5 // pred_check
        %p434 = pneg %p433
      $region58: #{tpu_custom_call.1} parent=5 // pred_check_branch
        %436 = sbr.rel (%p434) target = $region60
      $region59: #{tpu_custom_call.1} parent=5 // pred_region
        // Predicated region
        $region61: #{tpu_custom_call.1} parent=59 // pred_check
          %p437 = pneg %p48
        $region62: #{tpu_custom_call.1} parent=59 // pred_check_branch
          %439 = sbr.rel (%p437) target = $region64
        $region63: #{tpu_custom_call.1} parent=59 // pred_region
          %p440 = scmp.lt.s32.totalorder %s28, 1
          %s441 = scalar_select %p440, %s28, 1
          %s442 = smul.addr %s441, 8
          %s443 = smul.addr %s442, 8
          %s444 = scalar_lea.vmem %s0, %s443
        $region64: #{tpu_custom_call.1} parent=59 // pred_fallthru
          _
        // Predicated region
        $region65: #{tpu_custom_call.1} parent=59 // pred_check
          %p445 = pneg %p74
        $region66: #{tpu_custom_call.1} parent=59 // pred_check_branch
          %447 = sbr.rel (%p445) target = $region68
        $region67: #{tpu_custom_call.1} parent=59 // pred_region
          %s448 = sand.u32 %s64, 1
          %s449 = scalar_lea.sflag [#allocation3], %s448
          %s450 = sand.u32 %s64, 1
          %s451 = smul.addr %s450, 64
          %s452 = scalar_lea.vmem [#allocation2], %s451
          %s454 = ssub.s32 1024, 1024
          %455 = vsyncadd %s449, %s454
          %s456 = smul.addr %s28, 8
          %s457 = smul.addr %s456, 128
          %s458 = scalar_lea.hbm %s1, %s457
          %s459 = sshll.u32 %s452, 4
          %s460 = int_to_ptr.vmem [resolvable:$true] %s459
          %465 = dma.hbm_to_vmem [thread:$0]  %s458, 1024, %s460, %s449, 256, 256, 16
        $region68: #{tpu_custom_call.1} parent=59 // pred_fallthru
          _
      $region60: #{tpu_custom_call.1} parent=5 // pred_fallthru
        _
      %p466 = scmp.le.s32.totalorder 1, %s28
      %p467 = scmp.lt.s32.totalorder %s28, 3
      %p468 = pnand %p466, %p467
      %p469 = pneg %p468
      // Predicated region
      $region69: #{tpu_custom_call.1} parent=5 // pred_check
        _
      $region70: #{tpu_custom_call.1} parent=5 // pred_check_branch
        %471 = sbr.rel (%p468) target = $region72
      $region71: #{tpu_custom_call.1} parent=5 // pred_region
        %s472 = ssub.s32 %s28, 1
        %s473 = sand.u32 %s67, 1
        %s474 = scalar_lea.sflag [#allocation3], %s473
        %s475 = sand.u32 %s67, 1
        %s476 = smul.addr %s475, 64
        %s477 = scalar_lea.vmem [#allocation2], %s476
        // Predicated region
        $region73: #{tpu_custom_call.1} parent=71 // pred_check
          %p478 = pneg %p80
        $region74: #{tpu_custom_call.1} parent=71 // pred_check_branch
          %480 = sbr.rel (%p478) target = $region76
        $region75: #{tpu_custom_call.1} parent=71 // pred_region
          %481 = dma.done %s474, 1024
        $region76: #{tpu_custom_call.1} parent=71 // pred_fallthru
          _
        // Predicated region
        $region77: #{tpu_custom_call.1} parent=71 // pred_check
          %p482 = pneg %p101
        $region78: #{tpu_custom_call.1} parent=71 // pred_check_branch
          %484 = sbr.rel (%p482) target = $region80
        $region79: #{tpu_custom_call.1} parent=71 // pred_region
          %485 = dma.done [#allocation6], 768
        $region80: #{tpu_custom_call.1} parent=71 // pred_fallthru
          _
        // Predicated region
        $region81: #{tpu_custom_call.1} parent=71 // pred_check
          %p486 = pneg %p122
        $region82: #{tpu_custom_call.1} parent=71 // pred_check_branch
          %488 = sbr.rel (%p486) target = $region84
        $region83: #{tpu_custom_call.1} parent=71 // pred_region
          %489 = dma.done [#allocation6], 32
        $region84: #{tpu_custom_call.1} parent=71 // pred_fallthru
          _
        // Predicated region
        $region85: #{tpu_custom_call.1} parent=71 // pred_check
          %p490 = pneg %p227
        $region86: #{tpu_custom_call.1} parent=71 // pred_check_branch
          %492 = sbr.rel (%p490) target = $region88
        $region87: #{tpu_custom_call.1} parent=71 // pred_region
          %493 = dma.done [#allocation9], 256
        $region88: #{tpu_custom_call.1} parent=71 // pred_fallthru
          _
        // Predicated region
        $region89: #{tpu_custom_call.1} parent=71 // pred_check
          %p494 = pneg %p269
        $region90: #{tpu_custom_call.1} parent=71 // pred_check_branch
          %496 = sbr.rel (%p494) target = $region92
        $region91: #{tpu_custom_call.1} parent=71 // pred_region
          %497 = dma.done [#allocation9], 256
        $region92: #{tpu_custom_call.1} parent=71 // pred_fallthru
          _
        // Predicated region
        $region93: #{tpu_custom_call.1} parent=71 // pred_check
          %p498 = pneg %p290
        $region94: #{tpu_custom_call.1} parent=71 // pred_check_branch
          %500 = sbr.rel (%p498) target = $region96
        $region95: #{tpu_custom_call.1} parent=71 // pred_region
          %501 = dma.done [#allocation12], 256
        $region96: #{tpu_custom_call.1} parent=71 // pred_fallthru
          _
        %p502 = scmp.lt.s32.totalorder %s33, 1
        %s503 = scalar_select %p502, %s33, 1
        %s504 = smul.addr %s503, 8
        %s505 = smul.addr %s504, 8
        %s506 = scalar_lea.vmem %s0, %s505
        %p507 = pneg %p54
        %p508 = pneg %p51
        %s509 = sand.u32 %s67, 1
        %s510 = scalar_lea.sflag [#allocation3], %s509
        %s511 = sand.u32 %s67, 1
        %s512 = smul.addr %s511, 64
        %s513 = scalar_lea.vmem [#allocation2], %s512
        %p514 = pneg %p80
        %p515 = pneg %p77
        %p516 = pneg %p101
        %p517 = pneg %p98
        %p518 = pneg %p122
        %p519 = pneg %p119
        %p520 = pneg %p143
        %p521 = pneg %p140
        %p522 = pneg %p164
        %p523 = pneg %p161
        %p524 = pneg %p185
        %p525 = pneg %p182
        %p526 = pneg %p206
        %p527 = pneg %p203
        %p528 = pneg %p227
        %p529 = pneg %p224
        %p530 = pneg %p248
        %p531 = pneg %p245
        %p532 = pneg %p269
        %p533 = pneg %p266
        %p534 = pneg %p290
        %p535 = pneg %p287
        %p536 = pneg %p311
        %p537 = pneg %p308
        %p538 = pneg %p337
        %p539 = pneg %p334
        %s540 = sand.u32 %s324, 1
        %s541 = scalar_lea.sflag [#allocation4], %s540
        %s542 = sand.u32 %s324, 1
        %s543 = smul.addr %s542, 64
        %s544 = scalar_lea.vmem [#allocation13], %s543
        %p545 = scmp.lt.s32.totalorder %s33, 1
        %s546 = scalar_select %p545, %s33, 1
        %s547 = smul.addr %s546, 8
        %s548 = smul.addr %s547, 8
        %s549 = scalar_lea.vmem %s0, %s548
        %v551 = vld [vmem:[%s549] sm:$0xff]
        %v552 = vld [vmem:[%s549 + $0x8] sm:$0xff]
        %v553 = vld [vmem:[%s549 + $0x10] sm:$0xff]
        %v554 = vld [vmem:[%s549 + $0x18] sm:$0xff]
        %v555 = vld [vmem:[%s549 + $0x20] sm:$0xff]
        %v556 = vld [vmem:[%s549 + $0x28] sm:$0xff]
        %v557 = vld [vmem:[%s549 + $0x30] sm:$0xff]
        %v558 = vld [vmem:[%s549 + $0x38] sm:$0xff]
        %v559 = vld [vmem:[%s477] sm:$0xff]
        %v560 = vld [vmem:[%s477 + $0x8] sm:$0xff]
        %v561 = vld [vmem:[%s477 + $0x10] sm:$0xff]
        %v562 = vld [vmem:[%s477 + $0x18] sm:$0xff]
        %v563 = vld [vmem:[%s477 + $0x20] sm:$0xff]
        %v564 = vld [vmem:[%s477 + $0x28] sm:$0xff]
        %v565 = vld [vmem:[%s477 + $0x30] sm:$0xff]
        %v566 = vld [vmem:[%s477 + $0x38] sm:$0xff]
        %v567 = vmax.f32 %v551, %v555
        %v568 = vmax.f32 %v553, %v557
        %v569 = vmax.f32 %v567, %v568
        %v570 = vrot.slane %v569, 4
        %v571 = vmax.f32 %v569, %v570
        %v572 = vrot.slane %v571, 2
        %v573 = vmax.f32 %v571, %v572
        %v574 = vrot.slane %v573, 1
        %v575 = vmax.f32 %v573, %v574
        %v576 = vmax.f32 %v552, %v556
        %v577 = vmax.f32 %v554, %v558
        %v578 = vmax.f32 %v576, %v577
        %v579 = vrot.slane %v578, 4
        %v580 = vmax.f32 %v578, %v579
        %v581 = vrot.slane %v580, 2
        %v582 = vmax.f32 %v580, %v581
        %v583 = vrot.slane %v582, 1
        %v584 = vmax.f32 %v582, %v583
        %v585 = vadd.f32 %v551, %v553
        %v586 = vadd.f32 %v585, %v555
        %v587 = vadd.f32 %v586, %v557
        %v588 = vrot.slane %v587, 4
        %v589 = vadd.f32 %v587, %v588
        %v590 = vrot.slane %v589, 2
        %v591 = vadd.f32 %v589, %v590
        %v592 = vrot.slane %v591, 1
        %v593 = vadd.f32 %v591, %v592
        %v594 = vadd.f32 %v552, %v554
        %v595 = vadd.f32 %v594, %v556
        %v596 = vadd.f32 %v595, %v558
        %v597 = vrot.slane %v596, 4
        %v598 = vadd.f32 %v596, %v597
        %v599 = vrot.slane %v598, 2
        %v600 = vadd.f32 %v598, %v599
        %v601 = vrot.slane %v600, 1
        %v602 = vadd.f32 %v600, %v601
        %v603 = vmul.f32 %v593, 0.03125
        %v604 = vmul.f32 %v602, 0.03125
        %s605 = scalar_lea.vmem [#allocation5], 34
        %v606 = vld [vmem:[%s605] ss:$8 sm:$0x3]
        %607 = vrot.lane.b32.xlu0 %v575, 17
        %v608 = vpop.permute.xlu0 %607
        %609 = vrot.lane.b32.xlu0 %v584, 17
        %v610 = vpop.permute.xlu0 %609
        %v611 = vlaneseq
        %v612 = vand.u32 %v611, 127
        %vm613 = vcmp.lt.s32.totalorder %v612, 17
        %v614 = vsel %vm613, %v608, %v610
        %v615 = vsel %vm613, %v610, %v608
        %v616 = vld [vmem:[#allocation5] ss:$8 sm:$0x3]
        %v618 = vlaneseq
        %v619 = vshrl.u32 %v618, 7
        %v620 = vsub.s32 0, %v619
        %v621 = vrot.slane %v616, %v620
        %v622 = vlaneseq
        %v623 = vshrl.u32 %v622, 7
        %v624 = vsub.s32 1, %v623
        %v625 = vrot.slane %v616, %v624
        %v628 = vmul.f32 %v615, %v621
        %v629 = vmul.f32 %v614, %v625
        %v632 = vcombine.low %v628, %v629
        %v634 = vunpack.c.l.s4 1966171168
        %v635 = vunpack.c.0.s8 %v634
        %v636 = vlaneseq
        %v637 = vshrl.u32 %v636, 7
        %v638 = vsub.s32 %v635, %v637
        %v639 = vrot.slane %v632, %v638
        %v641 = vunpack.c.l.s4 1966171168
        %v642 = vunpack.c.0.s8 %v641
        %v643 = vlaneseq
        %v644 = vshrl.u32 %v643, 7
        %v645 = vsub.s32 %v642, %v644
        %v646 = vrot.slane %v639, %v645
        %v648 = vadd.f32 %v606, %v646
        %649 = vrot.lane.b32.xlu0 %v575, 16
        %v650 = vpop.permute.xlu0 %649
        %651 = vrot.lane.b32.xlu0 %v584, 16
        %v652 = vpop.permute.xlu0 %651
        %vm653 = vcmp.lt.s32.totalorder %v612, 16
        %v654 = vsel %vm653, %v650, %v652
        %v655 = vsel %vm653, %v652, %v650
        %s656 = scalar_lea.vmem [#allocation5], 1
        %v657 = vld [vmem:[%s656] ss:$8 sm:$0x3]
        %v659 = vlaneseq
        %v660 = vshrl.u32 %v659, 7
        %v661 = vsub.s32 0, %v660
        %v662 = vrot.slane %v657, %v661
        %v663 = vlaneseq
        %v664 = vshrl.u32 %v663, 7
        %v665 = vsub.s32 1, %v664
        %v666 = vrot.slane %v657, %v665
        %v669 = vmul.f32 %v655, %v662
        %v670 = vmul.f32 %v654, %v666
        %v673 = vcombine.low %v669, %v670
        %v675 = vunpack.c.l.s4 1966171168
        %v676 = vunpack.c.0.s8 %v675
        %v677 = vlaneseq
        %v678 = vshrl.u32 %v677, 7
        %v679 = vsub.s32 %v676, %v678
        %v680 = vrot.slane %v673, %v679
        %v682 = vunpack.c.l.s4 1966171168
        %v683 = vunpack.c.0.s8 %v682
        %v684 = vlaneseq
        %v685 = vshrl.u32 %v684, 7
        %v686 = vsub.s32 %v683, %v685
        %v687 = vrot.slane %v680, %v686
        %v689 = vadd.f32 %v648, %v687
        %690 = vrot.lane.b32.xlu0 %v575, 15
        %v691 = vpop.permute.xlu0 %690
        %692 = vrot.lane.b32.xlu0 %v584, 15
        %v693 = vpop.permute.xlu0 %692
        %vm694 = vcmp.lt.s32.totalorder %v612, 15
        %v695 = vsel %vm694, %v691, %v693
        %v696 = vsel %vm694, %v693, %v691
        %s697 = scalar_lea.vmem [#allocation5], 2
        %v698 = vld [vmem:[%s697] ss:$8 sm:$0x3]
        %v700 = vlaneseq
        %v701 = vshrl.u32 %v700, 7
        %v702 = vsub.s32 0, %v701
        %v703 = vrot.slane %v698, %v702
        %v704 = vlaneseq
        %v705 = vshrl.u32 %v704, 7
        %v706 = vsub.s32 1, %v705
        %v707 = vrot.slane %v698, %v706
        %v710 = vmul.f32 %v696, %v703
        %v711 = vmul.f32 %v695, %v707
        %v714 = vcombine.low %v710, %v711
        %v716 = vunpack.c.l.s4 1966171168
        %v717 = vunpack.c.0.s8 %v716
        %v718 = vlaneseq
        %v719 = vshrl.u32 %v718, 7
        %v720 = vsub.s32 %v717, %v719
        %v721 = vrot.slane %v714, %v720
        %v723 = vunpack.c.l.s4 1966171168
        %v724 = vunpack.c.0.s8 %v723
        %v725 = vlaneseq
        %v726 = vshrl.u32 %v725, 7
        %v727 = vsub.s32 %v724, %v726
        %v728 = vrot.slane %v721, %v727
        %v730 = vadd.f32 %v689, %v728
        %731 = vrot.lane.b32.xlu0 %v575, 1
        %v732 = vpop.permute.xlu0 %731
        %733 = vrot.lane.b32.xlu0 %v584, 1
        %v734 = vpop.permute.xlu0 %733
        %vm735 = vcmp.lt.s32.totalorder %v612, 1
        %v736 = vsel %vm735, %v732, %v734
        %v737 = vsel %vm735, %v734, %v732
        %s738 = scalar_lea.vmem [#allocation5], 3
        %v739 = vld [vmem:[%s738] ss:$8 sm:$0x3]
        %v741 = vlaneseq
        %v742 = vshrl.u32 %v741, 7
        %v743 = vsub.s32 0, %v742
        %v744 = vrot.slane %v739, %v743
        %v745 = vlaneseq
        %v746 = vshrl.u32 %v745, 7
        %v747 = vsub.s32 1, %v746
        %v748 = vrot.slane %v739, %v747
        %v751 = vmul.f32 %v737, %v744
        %v752 = vmul.f32 %v736, %v748
        %v755 = vcombine.low %v751, %v752
        %v757 = vunpack.c.l.s4 1966171168
        %v758 = vunpack.c.0.s8 %v757
        %v759 = vlaneseq
        %v760 = vshrl.u32 %v759, 7
        %v761 = vsub.s32 %v758, %v760
        %v762 = vrot.slane %v755, %v761
        %v764 = vunpack.c.l.s4 1966171168
        %v765 = vunpack.c.0.s8 %v764
        %v766 = vlaneseq
        %v767 = vshrl.u32 %v766, 7
        %v768 = vsub.s32 %v765, %v767
        %v769 = vrot.slane %v762, %v768
        %v771 = vadd.f32 %v730, %v769
        %s772 = scalar_lea.vmem [#allocation5], 4
        %v773 = vld [vmem:[%s772] ss:$8 sm:$0x3]
        %v775 = vlaneseq
        %v776 = vshrl.u32 %v775, 7
        %v777 = vsub.s32 0, %v776
        %v778 = vrot.slane %v773, %v777
        %v779 = vlaneseq
        %v780 = vshrl.u32 %v779, 7
        %v781 = vsub.s32 1, %v780
        %v782 = vrot.slane %v773, %v781
        %v785 = vmul.f32 %v575, %v778
        %v786 = vmul.f32 %v584, %v782
        %v789 = vcombine.low %v785, %v786
        %v791 = vunpack.c.l.s4 1966171168
        %v792 = vunpack.c.0.s8 %v791
        %v793 = vlaneseq
        %v794 = vshrl.u32 %v793, 7
        %v795 = vsub.s32 %v792, %v794
        %v796 = vrot.slane %v789, %v795
        %v798 = vunpack.c.l.s4 1966171168
        %v799 = vunpack.c.0.s8 %v798
        %v800 = vlaneseq
        %v801 = vshrl.u32 %v800, 7
        %v802 = vsub.s32 %v799, %v801
        %v803 = vrot.slane %v796, %v802
        %v805 = vadd.f32 %v771, %v803
        %806 = vrot.lane.b32.xlu0 %v575, 127
        %v807 = vpop.permute.xlu0 %806
        %808 = vrot.lane.b32.xlu0 %v584, 127
        %v809 = vpop.permute.xlu0 %808
        %vm810 = vcmp.lt.s32.totalorder %v612, 127
        %v811 = vsel %vm810, %v807, %v809
        %v812 = vsel %vm810, %v809, %v807
        %s813 = scalar_lea.vmem [#allocation5], 5
        %v814 = vld [vmem:[%s813] ss:$8 sm:$0x3]
        %v816 = vlaneseq
        %v817 = vshrl.u32 %v816, 7
        %v818 = vsub.s32 0, %v817
        %v819 = vrot.slane %v814, %v818
        %v820 = vlaneseq
        %v821 = vshrl.u32 %v820, 7
        %v822 = vsub.s32 1, %v821
        %v823 = vrot.slane %v814, %v822
        %v826 = vmul.f32 %v811, %v819
        %v827 = vmul.f32 %v812, %v823
        %v830 = vcombine.low %v826, %v827
        %v832 = vunpack.c.l.s4 1966171168
        %v833 = vunpack.c.0.s8 %v832
        %v834 = vlaneseq
        %v835 = vshrl.u32 %v834, 7
        %v836 = vsub.s32 %v833, %v835
        %v837 = vrot.slane %v830, %v836
        %v839 = vunpack.c.l.s4 1966171168
        %v840 = vunpack.c.0.s8 %v839
        %v841 = vlaneseq
        %v842 = vshrl.u32 %v841, 7
        %v843 = vsub.s32 %v840, %v842
        %v844 = vrot.slane %v837, %v843
        %v846 = vadd.f32 %v805, %v844
        %847 = vrot.lane.b32.xlu0 %v575, 113
        %v848 = vpop.permute.xlu0 %847
        %849 = vrot.lane.b32.xlu0 %v584, 113
        %v850 = vpop.permute.xlu0 %849
        %vm851 = vcmp.lt.s32.totalorder %v612, 113
        %v852 = vsel %vm851, %v848, %v850
        %v853 = vsel %vm851, %v850, %v848
        %s854 = scalar_lea.vmem [#allocation5], 6
        %v855 = vld [vmem:[%s854] ss:$8 sm:$0x3]
        %v857 = vlaneseq
        %v858 = vshrl.u32 %v857, 7
        %v859 = vsub.s32 0, %v858
        %v860 = vrot.slane %v855, %v859
        %v861 = vlaneseq
        %v862 = vshrl.u32 %v861, 7
        %v863 = vsub.s32 1, %v862
        %v864 = vrot.slane %v855, %v863
        %v867 = vmul.f32 %v852, %v860
        %v868 = vmul.f32 %v853, %v864
        %v871 = vcombine.low %v867, %v868
        %v873 = vunpack.c.l.s4 1966171168
        %v874 = vunpack.c.0.s8 %v873
        %v875 = vlaneseq
        %v876 = vshrl.u32 %v875, 7
        %v877 = vsub.s32 %v874, %v876
        %v878 = vrot.slane %v871, %v877
        %v880 = vunpack.c.l.s4 1966171168
        %v881 = vunpack.c.0.s8 %v880
        %v882 = vlaneseq
        %v883 = vshrl.u32 %v882, 7
        %v884 = vsub.s32 %v881, %v883
        %v885 = vrot.slane %v878, %v884
        %v887 = vadd.f32 %v846, %v885
        %888 = vrot.lane.b32.xlu0 %v575, 112
        %v889 = vpop.permute.xlu0 %888
        %890 = vrot.lane.b32.xlu0 %v584, 112
        %v891 = vpop.permute.xlu0 %890
        %vm892 = vcmp.lt.s32.totalorder %v612, 112
        %v893 = vsel %vm892, %v889, %v891
        %v894 = vsel %vm892, %v891, %v889
        %s895 = scalar_lea.vmem [#allocation5], 7
        %v896 = vld [vmem:[%s895] ss:$8 sm:$0x3]
        %v898 = vlaneseq
        %v899 = vshrl.u32 %v898, 7
        %v900 = vsub.s32 0, %v899
        %v901 = vrot.slane %v896, %v900
        %v902 = vlaneseq
        %v903 = vshrl.u32 %v902, 7
        %v904 = vsub.s32 1, %v903
        %v905 = vrot.slane %v896, %v904
        %v908 = vmul.f32 %v893, %v901
        %v909 = vmul.f32 %v894, %v905
        %v912 = vcombine.low %v908, %v909
        %v914 = vunpack.c.l.s4 1966171168
        %v915 = vunpack.c.0.s8 %v914
        %v916 = vlaneseq
        %v917 = vshrl.u32 %v916, 7
        %v918 = vsub.s32 %v915, %v917
        %v919 = vrot.slane %v912, %v918
        %v921 = vunpack.c.l.s4 1966171168
        %v922 = vunpack.c.0.s8 %v921
        %v923 = vlaneseq
        %v924 = vshrl.u32 %v923, 7
        %v925 = vsub.s32 %v922, %v924
        %v926 = vrot.slane %v919, %v925
        %v928 = vadd.f32 %v887, %v926
        %929 = vrot.lane.b32.xlu0 %v575, 111
        %v930 = vpop.permute.xlu0 %929
        %931 = vrot.lane.b32.xlu0 %v584, 111
        %v932 = vpop.permute.xlu0 %931
        %vm933 = vcmp.lt.s32.totalorder %v612, 111
        %v934 = vsel %vm933, %v930, %v932
        %v935 = vsel %vm933, %v932, %v930
        %s936 = scalar_lea.vmem [#allocation5], 16
        %v937 = vld [vmem:[%s936] ss:$8 sm:$0x3]
        %v939 = vlaneseq
        %v940 = vshrl.u32 %v939, 7
        %v941 = vsub.s32 0, %v940
        %v942 = vrot.slane %v937, %v941
        %v943 = vlaneseq
        %v944 = vshrl.u32 %v943, 7
        %v945 = vsub.s32 1, %v944
        %v946 = vrot.slane %v937, %v945
        %v949 = vmul.f32 %v934, %v942
        %v950 = vmul.f32 %v935, %v946
        %v953 = vcombine.low %v949, %v950
        %v955 = vunpack.c.l.s4 1966171168
        %v956 = vunpack.c.0.s8 %v955
        %v957 = vlaneseq
        %v958 = vshrl.u32 %v957, 7
        %v959 = vsub.s32 %v956, %v958
        %v960 = vrot.slane %v953, %v959
        %v962 = vunpack.c.l.s4 1966171168
        %v963 = vunpack.c.0.s8 %v962
        %v964 = vlaneseq
        %v965 = vshrl.u32 %v964, 7
        %v966 = vsub.s32 %v963, %v965
        %v967 = vrot.slane %v960, %v966
        %v969 = vadd.f32 %v928, %v967
        %970 = vrot.lane.b32.xlu0 %v603, 17
        %v971 = vpop.permute.xlu0 %970
        %972 = vrot.lane.b32.xlu0 %v604, 17
        %v973 = vpop.permute.xlu0 %972
        %v974 = vsel %vm613, %v971, %v973
        %v975 = vsel %vm613, %v973, %v971
        %s976 = scalar_lea.vmem [#allocation5], 17
        %v977 = vld [vmem:[%s976] ss:$8 sm:$0x3]
        %v979 = vlaneseq
        %v980 = vshrl.u32 %v979, 7
        %v981 = vsub.s32 0, %v980
        %v982 = vrot.slane %v977, %v981
        %v983 = vlaneseq
        %v984 = vshrl.u32 %v983, 7
        %v985 = vsub.s32 1, %v984
        %v986 = vrot.slane %v977, %v985
        %v989 = vmul.f32 %v975, %v982
        %v990 = vmul.f32 %v974, %v986
        %v993 = vcombine.low %v989, %v990
        %v995 = vunpack.c.l.s4 1966171168
        %v996 = vunpack.c.0.s8 %v995
        %v997 = vlaneseq
        %v998 = vshrl.u32 %v997, 7
        %v999 = vsub.s32 %v996, %v998
        %v1000 = vrot.slane %v993, %v999
        %v1002 = vunpack.c.l.s4 1966171168
        %v1003 = vunpack.c.0.s8 %v1002
        %v1004 = vlaneseq
        %v1005 = vshrl.u32 %v1004, 7
        %v1006 = vsub.s32 %v1003, %v1005
        %v1007 = vrot.slane %v1000, %v1006
        %v1009 = vadd.f32 %v969, %v1007
        %1010 = vrot.lane.b32.xlu0 %v603, 16
        %v1011 = vpop.permute.xlu0 %1010
        %1012 = vrot.lane.b32.xlu0 %v604, 16
        %v1013 = vpop.permute.xlu0 %1012
        %v1014 = vsel %vm653, %v1011, %v1013
        %v1015 = vsel %vm653, %v1013, %v1011
        %s1016 = scalar_lea.vmem [#allocation5], 18
        %v1017 = vld [vmem:[%s1016] ss:$8 sm:$0x3]
        %v1019 = vlaneseq
        %v1020 = vshrl.u32 %v1019, 7
        %v1021 = vsub.s32 0, %v1020
        %v1022 = vrot.slane %v1017, %v1021
        %v1023 = vlaneseq
        %v1024 = vshrl.u32 %v1023, 7
        %v1025 = vsub.s32 1, %v1024
        %v1026 = vrot.slane %v1017, %v1025
        %v1029 = vmul.f32 %v1015, %v1022
        %v1030 = vmul.f32 %v1014, %v1026
        %v1033 = vcombine.low %v1029, %v1030
        %v1035 = vunpack.c.l.s4 1966171168
        %v1036 = vunpack.c.0.s8 %v1035
        %v1037 = vlaneseq
        %v1038 = vshrl.u32 %v1037, 7
        %v1039 = vsub.s32 %v1036, %v1038
        %v1040 = vrot.slane %v1033, %v1039
        %v1042 = vunpack.c.l.s4 1966171168
        %v1043 = vunpack.c.0.s8 %v1042
        %v1044 = vlaneseq
        %v1045 = vshrl.u32 %v1044, 7
        %v1046 = vsub.s32 %v1043, %v1045
        %v1047 = vrot.slane %v1040, %v1046
        %v1049 = vadd.f32 %v1009, %v1047
        %1050 = vrot.lane.b32.xlu0 %v603, 15
        %v1051 = vpop.permute.xlu0 %1050
        %1052 = vrot.lane.b32.xlu0 %v604, 15
        %v1053 = vpop.permute.xlu0 %1052
        %v1054 = vsel %vm694, %v1051, %v1053
        %v1055 = vsel %vm694, %v1053, %v1051
        %s1056 = scalar_lea.vmem [#allocation5], 19
        %v1057 = vld [vmem:[%s1056] ss:$8 sm:$0x3]
        %v1059 = vlaneseq
        %v1060 = vshrl.u32 %v1059, 7
        %v1061 = vsub.s32 0, %v1060
        %v1062 = vrot.slane %v1057, %v1061
        %v1063 = vlaneseq
        %v1064 = vshrl.u32 %v1063, 7
        %v1065 = vsub.s32 1, %v1064
        %v1066 = vrot.slane %v1057, %v1065
        %v1069 = vmul.f32 %v1055, %v1062
        %v1070 = vmul.f32 %v1054, %v1066
        %v1073 = vcombine.low %v1069, %v1070
        %v1075 = vunpack.c.l.s4 1966171168
        %v1076 = vunpack.c.0.s8 %v1075
        %v1077 = vlaneseq
        %v1078 = vshrl.u32 %v1077, 7
        %v1079 = vsub.s32 %v1076, %v1078
        %v1080 = vrot.slane %v1073, %v1079
        %v1082 = vunpack.c.l.s4 1966171168
        %v1083 = vunpack.c.0.s8 %v1082
        %v1084 = vlaneseq
        %v1085 = vshrl.u32 %v1084, 7
        %v1086 = vsub.s32 %v1083, %v1085
        %v1087 = vrot.slane %v1080, %v1086
        %v1089 = vadd.f32 %v1049, %v1087
        %1090 = vrot.lane.b32.xlu0 %v603, 1
        %v1091 = vpop.permute.xlu0 %1090
        %1092 = vrot.lane.b32.xlu0 %v604, 1
        %v1093 = vpop.permute.xlu0 %1092
        %v1094 = vsel %vm735, %v1091, %v1093
        %v1095 = vsel %vm735, %v1093, %v1091
        %s1096 = scalar_lea.vmem [#allocation5], 20
        %v1097 = vld [vmem:[%s1096] ss:$8 sm:$0x3]
        %v1099 = vlaneseq
        %v1100 = vshrl.u32 %v1099, 7
        %v1101 = vsub.s32 0, %v1100
        %v1102 = vrot.slane %v1097, %v1101
        %v1103 = vlaneseq
        %v1104 = vshrl.u32 %v1103, 7
        %v1105 = vsub.s32 1, %v1104
        %v1106 = vrot.slane %v1097, %v1105
        %v1109 = vmul.f32 %v1095, %v1102
        %v1110 = vmul.f32 %v1094, %v1106
        %v1113 = vcombine.low %v1109, %v1110
        %v1115 = vunpack.c.l.s4 1966171168
        %v1116 = vunpack.c.0.s8 %v1115
        %v1117 = vlaneseq
        %v1118 = vshrl.u32 %v1117, 7
        %v1119 = vsub.s32 %v1116, %v1118
        %v1120 = vrot.slane %v1113, %v1119
        %v1122 = vunpack.c.l.s4 1966171168
        %v1123 = vunpack.c.0.s8 %v1122
        %v1124 = vlaneseq
        %v1125 = vshrl.u32 %v1124, 7
        %v1126 = vsub.s32 %v1123, %v1125
        %v1127 = vrot.slane %v1120, %v1126
        %v1129 = vadd.f32 %v1089, %v1127
        %s1130 = scalar_lea.vmem [#allocation5], 21
        %v1131 = vld [vmem:[%s1130] ss:$8 sm:$0x3]
        %v1133 = vlaneseq
        %v1134 = vshrl.u32 %v1133, 7
        %v1135 = vsub.s32 0, %v1134
        %v1136 = vrot.slane %v1131, %v1135
        %v1137 = vlaneseq
        %v1138 = vshrl.u32 %v1137, 7
        %v1139 = vsub.s32 1, %v1138
        %v1140 = vrot.slane %v1131, %v1139
        %v1143 = vmul.f32 %v603, %v1136
        %v1144 = vmul.f32 %v604, %v1140
        %v1147 = vcombine.low %v1143, %v1144
        %v1149 = vunpack.c.l.s4 1966171168
        %v1150 = vunpack.c.0.s8 %v1149
        %v1151 = vlaneseq
        %v1152 = vshrl.u32 %v1151, 7
        %v1153 = vsub.s32 %v1150, %v1152
        %v1154 = vrot.slane %v1147, %v1153
        %v1156 = vunpack.c.l.s4 1966171168
        %v1157 = vunpack.c.0.s8 %v1156
        %v1158 = vlaneseq
        %v1159 = vshrl.u32 %v1158, 7
        %v1160 = vsub.s32 %v1157, %v1159
        %v1161 = vrot.slane %v1154, %v1160
        %v1163 = vadd.f32 %v1129, %v1161
        %1164 = vrot.lane.b32.xlu0 %v603, 127
        %v1165 = vpop.permute.xlu0 %1164
        %1166 = vrot.lane.b32.xlu0 %v604, 127
        %v1167 = vpop.permute.xlu0 %1166
        %v1168 = vsel %vm810, %v1165, %v1167
        %v1169 = vsel %vm810, %v1167, %v1165
        %s1170 = scalar_lea.vmem [#allocation5], 22
        %v1171 = vld [vmem:[%s1170] ss:$8 sm:$0x3]
        %v1173 = vlaneseq
        %v1174 = vshrl.u32 %v1173, 7
        %v1175 = vsub.s32 0, %v1174
        %v1176 = vrot.slane %v1171, %v1175
        %v1177 = vlaneseq
        %v1178 = vshrl.u32 %v1177, 7
        %v1179 = vsub.s32 1, %v1178
        %v1180 = vrot.slane %v1171, %v1179
        %v1183 = vmul.f32 %v1168, %v1176
        %v1184 = vmul.f32 %v1169, %v1180
        %v1187 = vcombine.low %v1183, %v1184
        %v1189 = vunpack.c.l.s4 1966171168
        %v1190 = vunpack.c.0.s8 %v1189
        %v1191 = vlaneseq
        %v1192 = vshrl.u32 %v1191, 7
        %v1193 = vsub.s32 %v1190, %v1192
        %v1194 = vrot.slane %v1187, %v1193
        %v1196 = vunpack.c.l.s4 1966171168
        %v1197 = vunpack.c.0.s8 %v1196
        %v1198 = vlaneseq
        %v1199 = vshrl.u32 %v1198, 7
        %v1200 = vsub.s32 %v1197, %v1199
        %v1201 = vrot.slane %v1194, %v1200
        %v1203 = vadd.f32 %v1163, %v1201
        %1204 = vrot.lane.b32.xlu0 %v603, 113
        %v1205 = vpop.permute.xlu0 %1204
        %1206 = vrot.lane.b32.xlu0 %v604, 113
        %v1207 = vpop.permute.xlu0 %1206
        %v1208 = vsel %vm851, %v1205, %v1207
        %v1209 = vsel %vm851, %v1207, %v1205
        %s1210 = scalar_lea.vmem [#allocation5], 23
        %v1211 = vld [vmem:[%s1210] ss:$8 sm:$0x3]
        %v1213 = vlaneseq
        %v1214 = vshrl.u32 %v1213, 7
        %v1215 = vsub.s32 0, %v1214
        %v1216 = vrot.slane %v1211, %v1215
        %v1217 = vlaneseq
        %v1218 = vshrl.u32 %v1217, 7
        %v1219 = vsub.s32 1, %v1218
        %v1220 = vrot.slane %v1211, %v1219
        %v1223 = vmul.f32 %v1208, %v1216
        %v1224 = vmul.f32 %v1209, %v1220
        %v1227 = vcombine.low %v1223, %v1224
        %v1229 = vunpack.c.l.s4 1966171168
        %v1230 = vunpack.c.0.s8 %v1229
        %v1231 = vlaneseq
        %v1232 = vshrl.u32 %v1231, 7
        %v1233 = vsub.s32 %v1230, %v1232
        %v1234 = vrot.slane %v1227, %v1233
        %v1236 = vunpack.c.l.s4 1966171168
        %v1237 = vunpack.c.0.s8 %v1236
        %v1238 = vlaneseq
        %v1239 = vshrl.u32 %v1238, 7
        %v1240 = vsub.s32 %v1237, %v1239
        %v1241 = vrot.slane %v1234, %v1240
        %v1243 = vadd.f32 %v1203, %v1241
        %1244 = vrot.lane.b32.xlu0 %v603, 112
        %v1245 = vpop.permute.xlu0 %1244
        %1246 = vrot.lane.b32.xlu0 %v604, 112
        %v1247 = vpop.permute.xlu0 %1246
        %v1248 = vsel %vm892, %v1245, %v1247
        %v1249 = vsel %vm892, %v1247, %v1245
        %s1250 = scalar_lea.vmem [#allocation5], 32
        %v1251 = vld [vmem:[%s1250] ss:$8 sm:$0x3]
        %v1253 = vlaneseq
        %v1254 = vshrl.u32 %v1253, 7
        %v1255 = vsub.s32 0, %v1254
        %v1256 = vrot.slane %v1251, %v1255
        %v1257 = vlaneseq
        %v1258 = vshrl.u32 %v1257, 7
        %v1259 = vsub.s32 1, %v1258
        %v1260 = vrot.slane %v1251, %v1259
        %v1263 = vmul.f32 %v1248, %v1256
        %v1264 = vmul.f32 %v1249, %v1260
        %v1267 = vcombine.low %v1263, %v1264
        %v1269 = vunpack.c.l.s4 1966171168
        %v1270 = vunpack.c.0.s8 %v1269
        %v1271 = vlaneseq
        %v1272 = vshrl.u32 %v1271, 7
        %v1273 = vsub.s32 %v1270, %v1272
        %v1274 = vrot.slane %v1267, %v1273
        %v1276 = vunpack.c.l.s4 1966171168
        %v1277 = vunpack.c.0.s8 %v1276
        %v1278 = vlaneseq
        %v1279 = vshrl.u32 %v1278, 7
        %v1280 = vsub.s32 %v1277, %v1279
        %v1281 = vrot.slane %v1274, %v1280
        %v1283 = vadd.f32 %v1243, %v1281
        %1284 = vrot.lane.b32.xlu0 %v603, 111
        %v1285 = vpop.permute.xlu0 %1284
        %1286 = vrot.lane.b32.xlu0 %v604, 111
        %v1287 = vpop.permute.xlu0 %1286
        %v1288 = vsel %vm933, %v1285, %v1287
        %v1289 = vsel %vm933, %v1287, %v1285
        %s1290 = scalar_lea.vmem [#allocation5], 33
        %v1291 = vld [vmem:[%s1290] ss:$8 sm:$0x3]
        %v1293 = vlaneseq
        %v1294 = vshrl.u32 %v1293, 7
        %v1295 = vsub.s32 0, %v1294
        %v1296 = vrot.slane %v1291, %v1295
        %v1297 = vlaneseq
        %v1298 = vshrl.u32 %v1297, 7
        %v1299 = vsub.s32 1, %v1298
        %v1300 = vrot.slane %v1291, %v1299
        %v1303 = vmul.f32 %v1288, %v1296
        %v1304 = vmul.f32 %v1289, %v1300
        %v1307 = vcombine.low %v1303, %v1304
        %v1309 = vunpack.c.l.s4 1966171168
        %v1310 = vunpack.c.0.s8 %v1309
        %v1311 = vlaneseq
        %v1312 = vshrl.u32 %v1311, 7
        %v1313 = vsub.s32 %v1310, %v1312
        %v1314 = vrot.slane %v1307, %v1313
        %v1316 = vunpack.c.l.s4 1966171168
        %v1317 = vunpack.c.0.s8 %v1316
        %v1318 = vlaneseq
        %v1319 = vshrl.u32 %v1318, 7
        %v1320 = vsub.s32 %v1317, %v1319
        %v1321 = vrot.slane %v1314, %v1320
        %v1323 = vadd.f32 %v1283, %v1321
        %v1324 = vsub.f32 0.0, %v1323
        %v1325 = vmul.f32 %v1324, 1.442695
        %v1326 = vpow.pop %v1325
        %v1327 = vadd.f32 %v1326, 1.0
        %v1328 = vrcp.pop %v1327
        %v1330 = vlaneseq
        %v1331 = vshrl.u32 %v1330, 7
        %v1332 = vsub.s32 0, %v1331
        %v1333 = vrot.slane %v1328, %v1332
        %v1334 = vlaneseq
        %v1335 = vshrl.u32 %v1334, 7
        %v1336 = vsub.s32 1, %v1335
        %v1337 = vrot.slane %v1328, %v1336
        %v1340 = vmul.f32 %v551, %v1333
        %v1341 = vmul.f32 %v552, %v1337
        %v1342 = vmul.f32 %v553, %v1333
        %v1343 = vmul.f32 %v554, %v1337
        %v1344 = vmul.f32 %v555, %v1333
        %v1345 = vmul.f32 %v556, %v1337
        %v1346 = vmul.f32 %v557, %v1333
        %v1347 = vmul.f32 %v558, %v1337
        %v1348 = vadd.f32 %v551, %v552
        %1349 = vadd.xlane.f32.xlu0 %v1348
        %v1350 = vpop.xlane.xlu0 %1349
        %v1351 = vadd.f32 %v553, %v554
        %1352 = vadd.xlane.f32.xlu0 %v1351
        %v1353 = vpop.xlane.xlu0 %1352
        %v1354 = vadd.f32 %v555, %v556
        %1355 = vadd.xlane.f32.xlu0 %v1354
        %v1356 = vpop.xlane.xlu0 %1355
        %v1357 = vadd.f32 %v557, %v558
        %1358 = vadd.xlane.f32.xlu0 %v1357
        %v1359 = vpop.xlane.xlu0 %1358
        %v1360 = vmul.f32 %v1350, 0.00390625
        %v1361 = vmul.f32 %v1353, 0.00390625
        %v1362 = vmul.f32 %v1356, 0.00390625
        %v1363 = vmul.f32 %v1359, 0.00390625
        %v1364 = vld [vmem:[#allocation7] sm:$0x3]
        %v1365 = vld [vmem:[%s4] sm:$0x3]
        %vm1366 = vcmask 261120
        %v1368 = vsel %vm1366, %v1364, 0
        %1370 = vmatprep.subr.mxu0 0.0
        %1371 = vmatpush1.msra.mxu0 0.0
        %1372 = vmatprep.subr.mxu0 0.0
        %1373 = vmatpush1.msra.mxu0 0.0
        %1374 = vmatprep.subr.mxu0 0.0
        %1375 = vmatpush1.msra.mxu0 0.0
        %1376 = vmatprep.subr.mxu0 0.0
        %1377 = vmatpush1.msra.mxu0 0.0
        %1378 = vmatprep.subr.mxu0 0.0
        %1379 = vmatpush1.msra.mxu0 0.0
        %1380 = vmatprep.subr.mxu0 0.0
        %1381 = vmatpush1.msra.mxu0 0.0
        %1382 = vmatprep.subr.mxu0 0.0
        %1383 = vmatpush1.msra.mxu0 0.0
        %1384 = vmatprep.subr.mxu0 0.0
        %1385 = vmatpush1.msra.mxu0 0.0
        %1386 = vmatprep.subr.mxu0 0.0
        %1387 = vmatpush1.msra.mxu0 0.0
        %1388 = vmatprep.subr.mxu0 0.0
        %1389 = vmatpush1.msra.mxu0 0.0
        %1390 = vmatprep.subr.mxu0 0.0
        %1391 = vmatpush1.msra.mxu0 0.0
        %1392 = vmatprep.subr.mxu0 0.0
        %1393 = vmatpush1.msra.mxu0 0.0
        %1394 = vmatprep.subr.mxu0 0.0
        %1395 = vmatpush1.msra.mxu0 %v1363
        %1396 = vmatprep.subr.mxu0 0.0
        %1397 = vmatpush1.msra.mxu0 %v1362
        %1398 = vmatprep.subr.mxu0 0.0
        %1399 = vmatpush1.msra.mxu0 %v1361
        %1400 = vmatprep.subr.mxu0 0.0
        %1401 = vmatpush1.msra.mxu0 %v1360
        %1402 = vmatprep.subr.mxu0 0.0
        %1403 = vmatpush2.msra.mxu0 0.0
        %1404 = vmatprep.subr.mxu0 0.0
        %1405 = vmatpush2.msra.mxu0 0.0
        %1406 = vmatprep.subr.mxu0 0.0
        %1407 = vmatpush2.msra.mxu0 0.0
        %1408 = vmatprep.subr.mxu0 0.0
        %1409 = vmatpush2.msra.mxu0 0.0
        %1410 = vmatprep.subr.mxu0 0.0
        %1411 = vmatpush2.msra.mxu0 0.0
        %1412 = vmatprep.subr.mxu0 0.0
        %1413 = vmatpush2.msra.mxu0 0.0
        %1414 = vmatprep.subr.mxu0 0.0
        %1415 = vmatpush2.msra.mxu0 0.0
        %1416 = vmatprep.subr.mxu0 0.0
        %1417 = vmatpush2.msra.mxu0 0.0
        %1418 = vmatprep.subr.mxu0 0.0
        %1419 = vmatpush2.msra.mxu0 0.0
        %1420 = vmatprep.subr.mxu0 0.0
        %1421 = vmatpush2.msra.mxu0 0.0
        %1422 = vmatprep.subr.mxu0 0.0
        %1423 = vmatpush2.msra.mxu0 0.0
        %1424 = vmatprep.subr.mxu0 0.0
        %1425 = vmatpush2.msra.mxu0 0.0
        %1426 = vmatprep.subr.mxu0 0.0
        %1427 = vmatpush2.msra.mxu0 0.0
        %1428 = vmatprep.subr.mxu0 0.0
        %1429 = vmatpush2.msra.mxu0 0.0
        %1430 = vmatprep.subr.mxu0 0.0
        %1431 = vmatpush2.msra.mxu0 0.0
        %1432 = vmatprep.subr.mxu0 0.0
        %1433 = vmatpush2.msra.mxu0 0.0
        %1434 = vmatprep.mubr.f32.mxu0 0.0
        %1435 = vmatmul.mubr.f32.gmra.mxu0 %v1368
        %v1436 = vpop.f32.mrf.mxu0
        %v1437 = vadd.f32 %v1365, %v1436
        %v1438 = vpop.f32.mrf.mxu0
        %1439 = vdwg.mxu0
        %v1440 = vmax.f32 %v1437, 0.0
        %v1441 = vld [vmem:[%s5] sm:$0xff]
        %v1442 = vld [vmem:[%s5 + $0x8] sm:$0xff]
        %v1443 = vld [vmem:[%s5 + $0x10] sm:$0xff]
        %v1444 = vld [vmem:[%s5 + $0x18] sm:$0xff]
        %v1445 = vld [vmem:[%s6] sm:$0xff]
        %v1446 = vld [vmem:[%s6 + $0x8] sm:$0xff]
        %v1447 = vld [vmem:[%s6 + $0x10] sm:$0xff]
        %v1448 = vld [vmem:[%s6 + $0x18] sm:$0xff]
        %vm1449 = vcmask 15360
        %v1451 = vsel %vm1449, %v1441, 0
        %v1454 = vsel %vm1449, %v1442, 0
        %v1457 = vsel %vm1449, %v1443, 0
        %v1460 = vsel %vm1449, %v1444, 0
        %vm1462 = vcmask 1041408
        %v1464 = vsel %vm1462, %v1440, 0
        %1466 = vmatprep.subr.mxu0 0.0
        %1467 = vmatpush1.msra.mxu0 0.0
        %1468 = vmatprep.subr.mxu0 0.0
        %1469 = vmatpush1.msra.mxu0 0.0
        %1470 = vmatprep.subr.mxu0 0.0
        %1471 = vmatpush1.msra.mxu0 0.0
        %1472 = vmatprep.subr.mxu0 0.0
        %1473 = vmatpush1.msra.mxu0 0.0
        %1474 = vmatprep.subr.mxu0 0.0
        %1475 = vmatpush1.msra.mxu0 0.0
        %1476 = vmatprep.subr.mxu0 0.0
        %1477 = vmatpush1.msra.mxu0 0.0
        %1478 = vmatprep.subr.mxu0 0.0
        %1479 = vmatpush1.msra.mxu0 0.0
        %1480 = vmatprep.subr.mxu0 0.0
        %1481 = vmatpush1.msra.mxu0 0.0
        %1482 = vmatprep.subr.mxu0 0.0
        %1483 = vmatpush1.msra.mxu0 0.0
        %1484 = vmatprep.subr.mxu0 0.0
        %1485 = vmatpush1.msra.mxu0 0.0
        %1486 = vmatprep.subr.mxu0 0.0
        %1487 = vmatpush1.msra.mxu0 0.0
        %1488 = vmatprep.subr.mxu0 0.0
        %1489 = vmatpush1.msra.mxu0 0.0
        %1490 = vmatprep.subr.mxu0 0.0
        %1491 = vmatpush1.msra.mxu0 0.0
        %1492 = vmatprep.subr.mxu0 0.0
        %1493 = vmatpush1.msra.mxu0 0.0
        %1494 = vmatprep.subr.mxu0 0.0
        %1495 = vmatpush1.msra.mxu0 0.0
        %1496 = vmatprep.subr.mxu0 0.0
        %1497 = vmatpush1.msra.mxu0 %v1464
        %1498 = vmatprep.subr.mxu0 0.0
        %1499 = vmatpush2.msra.mxu0 0.0
        %1500 = vmatprep.subr.mxu0 0.0
        %1501 = vmatpush2.msra.mxu0 0.0
        %1502 = vmatprep.subr.mxu0 0.0
        %1503 = vmatpush2.msra.mxu0 0.0
        %1504 = vmatprep.subr.mxu0 0.0
        %1505 = vmatpush2.msra.mxu0 0.0
        %1506 = vmatprep.subr.mxu0 0.0
        %1507 = vmatpush2.msra.mxu0 0.0
        %1508 = vmatprep.subr.mxu0 0.0
        %1509 = vmatpush2.msra.mxu0 0.0
        %1510 = vmatprep.subr.mxu0 0.0
        %1511 = vmatpush2.msra.mxu0 0.0
        %1512 = vmatprep.subr.mxu0 0.0
        %1513 = vmatpush2.msra.mxu0 0.0
        %1514 = vmatprep.subr.mxu0 0.0
        %1515 = vmatpush2.msra.mxu0 0.0
        %1516 = vmatprep.subr.mxu0 0.0
        %1517 = vmatpush2.msra.mxu0 0.0
        %1518 = vmatprep.subr.mxu0 0.0
        %1519 = vmatpush2.msra.mxu0 0.0
        %1520 = vmatprep.subr.mxu0 0.0
        %1521 = vmatpush2.msra.mxu0 0.0
        %1522 = vmatprep.subr.mxu0 0.0
        %1523 = vmatpush2.msra.mxu0 0.0
        %1524 = vmatprep.subr.mxu0 0.0
        %1525 = vmatpush2.msra.mxu0 0.0
        %1526 = vmatprep.subr.mxu0 0.0
        %1527 = vmatpush2.msra.mxu0 0.0
        %1528 = vmatprep.subr.mxu0 0.0
        %1529 = vmatpush2.msra.mxu0 0.0
        %1530 = vmatprep.mubr.f32.mxu0 0.0
        %1531 = vmatmul.mubr.f32.gmra.mxu0 %v1451
        %v1532 = vpop.f32.mrf.mxu0
        %v1533 = vadd.f32 %v1445, %v1532
        %v1534 = vpop.f32.mrf.mxu0
        %1535 = vmatprep.mubr.f32.mxu0 0.0
        %1536 = vmatmul.mubr.f32.gmra.mxu0 %v1454
        %v1537 = vpop.f32.mrf.mxu0
        %v1538 = vadd.f32 %v1446, %v1537
        %v1539 = vpop.f32.mrf.mxu0
        %1540 = vmatprep.mubr.f32.mxu0 0.0
        %1541 = vmatmul.mubr.f32.gmra.mxu0 %v1457
        %v1542 = vpop.f32.mrf.mxu0
        %v1543 = vadd.f32 %v1447, %v1542
        %v1544 = vpop.f32.mrf.mxu0
        %1545 = vmatprep.mubr.f32.mxu0 0.0
        %1546 = vmatmul.mubr.f32.gmra.mxu0 %v1460
        %v1547 = vpop.f32.mrf.mxu0
        %v1548 = vadd.f32 %v1448, %v1547
        %v1549 = vpop.f32.mrf.mxu0
        %1550 = vdwg.mxu0
        %v1551 = vsub.f32 0.0, %v1533
        %v1552 = vsub.f32 0.0, %v1538
        %v1553 = vsub.f32 0.0, %v1543
        %v1554 = vsub.f32 0.0, %v1548
        %v1555 = vmul.f32 %v1551, 1.442695
        %v1556 = vpow.pop %v1555
        %v1557 = vmul.f32 %v1552, 1.442695
        %v1558 = vpow.pop %v1557
        %v1559 = vmul.f32 %v1553, 1.442695
        %v1560 = vpow.pop %v1559
        %v1561 = vmul.f32 %v1554, 1.442695
        %v1562 = vpow.pop %v1561
        %v1563 = vadd.f32 %v1556, 1.0
        %v1564 = vadd.f32 %v1558, 1.0
        %v1565 = vadd.f32 %v1560, 1.0
        %v1566 = vadd.f32 %v1562, 1.0
        %v1567 = vrcp.pop %v1563
        %v1568 = vrcp.pop %v1564
        %v1569 = vrcp.pop %v1565
        %v1570 = vrcp.pop %v1566
        %1572 = vset.pattern.permute.xlu0 0
        %1573 = vperm.xlu0 %1572, %v1567
        %v1574 = vpop.permute.xlu0 %1573
        %1577 = vset.pattern.permute.xlu0 0
        %1578 = vperm.xlu0 %1577, %v1568
        %v1579 = vpop.permute.xlu0 %1578
        %1582 = vset.pattern.permute.xlu0 0
        %1583 = vperm.xlu0 %1582, %v1569
        %v1584 = vpop.permute.xlu0 %1583
        %1587 = vset.pattern.permute.xlu0 0
        %1588 = vperm.xlu0 %1587, %v1570
        %v1589 = vpop.permute.xlu0 %1588
        %v1591 = vmul.f32 %v551, %v1574
        %v1592 = vmul.f32 %v552, %v1574
        %v1593 = vmul.f32 %v553, %v1579
        %v1594 = vmul.f32 %v554, %v1579
        %v1595 = vmul.f32 %v555, %v1584
        %v1596 = vmul.f32 %v556, %v1584
        %v1597 = vmul.f32 %v557, %v1589
        %v1598 = vmul.f32 %v558, %v1589
        %v1599 = vld [vmem:[%s7] sm:$0xf]
        %v1600 = vld [vmem:[%s7 + $0x4] sm:$0xf]
        %v1601 = vld [vmem:[%s7 + $0x8] sm:$0xf]
        %v1602 = vld [vmem:[%s7 + $0xc] sm:$0xf]
        %v1603 = vpack.c.bf16 %v1342, %v1340
        %v1604 = vpack.c.bf16 %v1343, %v1341
        %v1605 = vpack.c.bf16 %v1346, %v1344
        %v1606 = vpack.c.bf16 %v1347, %v1345
        %v1607 = vld [vmem:[#allocation8] sm:$0xf]
        %v1608 = vld [vmem:[#allocation8 + $0x4] sm:$0xf]
        %v1609 = vld [vmem:[#allocation8 + $0x8] sm:$0xf]
        %v1610 = vld [vmem:[#allocation8 + $0xc] sm:$0xf]
        %v1611 = vpack.c.bf16 %v1593, %v1591
        %v1612 = vpack.c.bf16 %v1594, %v1592
        %v1613 = vpack.c.bf16 %v1597, %v1595
        %v1614 = vpack.c.bf16 %v1598, %v1596
        %v1619 = vunpack.c.l.b16 %v1607
        %v1620 = vunpack.c.l.b16 %v1608
        %v1621 = vunpack.c.l.b16 %v1609
        %v1622 = vunpack.c.l.b16 %v1610
        %v1623 = vpack.c.b16 %v1620, %v1619
        %v1624 = vpack.c.b16 %v1622, %v1621
        %v1626 = vsel %vm1366, %v1623, 0
        %v1629 = vsel %vm1366, %v1624, 0
        %1631 = vmatprep.subr.bf16.mxu0 0
        %1632 = vmatpush1.bf16.msra.mxu0 0
        %1633 = vmatprep.subr.bf16.mxu0 0
        %1634 = vmatpush1.bf16.msra.mxu0 0
        %1635 = vmatprep.subr.bf16.mxu0 0
        %1636 = vmatpush1.bf16.msra.mxu0 0
        %1637 = vmatprep.subr.bf16.mxu0 0
        %1638 = vmatpush1.bf16.msra.mxu0 0
        %1639 = vmatprep.subr.bf16.mxu0 0
        %1640 = vmatpush1.bf16.msra.mxu0 0
        %1641 = vmatprep.subr.bf16.mxu0 0
        %1642 = vmatpush1.bf16.msra.mxu0 0
        %1643 = vmatprep.subr.bf16.mxu0 %v1614
        %1644 = vmatpush1.bf16.msra.mxu0 %v1613
        %1645 = vmatprep.subr.bf16.mxu0 %v1612
        %1646 = vmatpush1.bf16.msra.mxu0 %v1611
        %1647 = vmatprep.subr.bf16.mxu0 0
        %1648 = vmatpush2.bf16.msra.mxu0 0
        %1649 = vmatprep.subr.bf16.mxu0 0
        %1650 = vmatpush2.bf16.msra.mxu0 0
        %1651 = vmatprep.subr.bf16.mxu0 0
        %1652 = vmatpush2.bf16.msra.mxu0 0
        %1653 = vmatprep.subr.bf16.mxu0 0
        %1654 = vmatpush2.bf16.msra.mxu0 0
        %1655 = vmatprep.subr.bf16.mxu0 0
        %1656 = vmatpush2.bf16.msra.mxu0 0
        %1657 = vmatprep.subr.bf16.mxu0 0
        %1658 = vmatpush2.bf16.msra.mxu0 0
        %1659 = vmatprep.subr.bf16.mxu0 0
        %1660 = vmatpush2.bf16.msra.mxu0 0
        %1661 = vmatprep.subr.bf16.mxu0 0
        %1662 = vmatpush2.bf16.msra.mxu0 0
        %1663 = vmatprep.mubr.bf16.mxu0 0
        %1664 = vmatmul.mubr.bf16.gmra.mxu0 %v1626
        %v1665 = vpop.f32.mrf.mxu0
        %v1666 = vadd.f32 0.0, %v1665
        %v1667 = vpop.f32.mrf.mxu0
        %v1668 = vadd.f32 0.0, %v1667
        %v1669 = vpop.f32.mrf.mxu0
        %v1670 = vadd.f32 0.0, %v1669
        %v1671 = vpop.f32.mrf.mxu0
        %v1672 = vadd.f32 0.0, %v1671
        %1673 = vmatprep.mubr.bf16.mxu0 0
        %1674 = vmatmul.mubr.bf16.gmra.mxu0 %v1629
        %v1675 = vpop.f32.mrf.mxu0
        %v1676 = vadd.f32 0.0, %v1675
        %v1677 = vpop.f32.mrf.mxu0
        %v1678 = vadd.f32 0.0, %v1677
        %v1679 = vpop.f32.mrf.mxu0
        %v1680 = vadd.f32 0.0, %v1679
        %v1681 = vpop.f32.mrf.mxu0
        %v1682 = vadd.f32 0.0, %v1681
        %1683 = vdwg.mxu0
        %v1688 = vunpack.c.l.b16 %v1599
        %v1689 = vunpack.c.l.b16 %v1600
        %v1690 = vunpack.c.l.b16 %v1601
        %v1691 = vunpack.c.l.b16 %v1602
        %v1692 = vpack.c.b16 %v1689, %v1688
        %v1693 = vpack.c.b16 %v1691, %v1690
        %v1695 = vsel %vm1366, %v1692, 0
        %v1698 = vsel %vm1366, %v1693, 0
        %1700 = vmatprep.subr.bf16.mxu0 0
        %1701 = vmatpush1.bf16.msra.mxu0 0
        %1702 = vmatprep.subr.bf16.mxu0 0
        %1703 = vmatpush1.bf16.msra.mxu0 0
        %1704 = vmatprep.subr.bf16.mxu0 0
        %1705 = vmatpush1.bf16.msra.mxu0 0
        %1706 = vmatprep.subr.bf16.mxu0 0
        %1707 = vmatpush1.bf16.msra.mxu0 0
        %1708 = vmatprep.subr.bf16.mxu0 0
        %1709 = vmatpush1.bf16.msra.mxu0 0
        %1710 = vmatprep.subr.bf16.mxu0 0
        %1711 = vmatpush1.bf16.msra.mxu0 0
        %1712 = vmatprep.subr.bf16.mxu0 %v1606
        %1713 = vmatpush1.bf16.msra.mxu0 %v1605
        %1714 = vmatprep.subr.bf16.mxu0 %v1604
        %1715 = vmatpush1.bf16.msra.mxu0 %v1603
        %1716 = vmatprep.subr.bf16.mxu0 0
        %1717 = vmatpush2.bf16.msra.mxu0 0
        %1718 = vmatprep.subr.bf16.mxu0 0
        %1719 = vmatpush2.bf16.msra.mxu0 0
        %1720 = vmatprep.subr.bf16.mxu0 0
        %1721 = vmatpush2.bf16.msra.mxu0 0
        %1722 = vmatprep.subr.bf16.mxu0 0
        %1723 = vmatpush2.bf16.msra.mxu0 0
        %1724 = vmatprep.subr.bf16.mxu0 0
        %1725 = vmatpush2.bf16.msra.mxu0 0
        %1726 = vmatprep.subr.bf16.mxu0 0
        %1727 = vmatpush2.bf16.msra.mxu0 0
        %1728 = vmatprep.subr.bf16.mxu0 0
        %1729 = vmatpush2.bf16.msra.mxu0 0
        %1730 = vmatprep.subr.bf16.mxu0 0
        %1731 = vmatpush2.bf16.msra.mxu0 0
        %1732 = vmatprep.mubr.bf16.mxu0 0
        %1733 = vmatmul.mubr.bf16.gmra.mxu0 %v1695
        %v1734 = vpop.f32.mrf.mxu0
        %v1735 = vadd.f32 %v1666, %v1734
        %v1736 = vpop.f32.mrf.mxu0
        %v1737 = vadd.f32 %v1668, %v1736
        %v1738 = vpop.f32.mrf.mxu0
        %v1739 = vadd.f32 %v1670, %v1738
        %v1740 = vpop.f32.mrf.mxu0
        %v1741 = vadd.f32 %v1672, %v1740
        %1742 = vmatprep.mubr.bf16.mxu0 0
        %1743 = vmatmul.mubr.bf16.gmra.mxu0 %v1698
        %v1744 = vpop.f32.mrf.mxu0
        %v1745 = vadd.f32 %v1676, %v1744
        %v1746 = vpop.f32.mrf.mxu0
        %v1747 = vadd.f32 %v1678, %v1746
        %v1748 = vpop.f32.mrf.mxu0
        %v1749 = vadd.f32 %v1680, %v1748
        %v1750 = vpop.f32.mrf.mxu0
        %v1751 = vadd.f32 %v1682, %v1750
        %1752 = vdwg.mxu0
        %v1753 = vld [vmem:[%s9] sm:$0xff]
        %v1754 = vld [vmem:[%s9 + $0x8] sm:$0xff]
        %v1755 = vld [vmem:[%s9 + $0x10] sm:$0xff]
        %v1756 = vld [vmem:[%s9 + $0x18] sm:$0xff]
        %1758 = vset.pattern.permute.xlu0 0
        %1759 = vperm.xlu0 %1758, %v1753
        %v1760 = vpop.permute.xlu0 %1759
        %1763 = vset.pattern.permute.xlu0 0
        %1764 = vperm.xlu0 %1763, %v1754
        %v1765 = vpop.permute.xlu0 %1764
        %1768 = vset.pattern.permute.xlu0 0
        %1769 = vperm.xlu0 %1768, %v1755
        %v1770 = vpop.permute.xlu0 %1769
        %1773 = vset.pattern.permute.xlu0 0
        %1774 = vperm.xlu0 %1773, %v1756
        %v1775 = vpop.permute.xlu0 %1774
        %v1777 = vadd.f32 %v1735, %v1760
        %v1778 = vadd.f32 %v1737, %v1760
        %v1779 = vadd.f32 %v1739, %v1765
        %v1780 = vadd.f32 %v1741, %v1765
        %v1781 = vadd.f32 %v1745, %v1770
        %v1782 = vadd.f32 %v1747, %v1770
        %v1783 = vadd.f32 %v1749, %v1775
        %v1784 = vadd.f32 %v1751, %v1775
        %v1785 = vld [vmem:[#allocation10] sm:$0xf]
        %v1786 = vld [vmem:[#allocation10 + $0x4] sm:$0xf]
        %v1787 = vld [vmem:[#allocation10 + $0x8] sm:$0xf]
        %v1788 = vld [vmem:[#allocation10 + $0xc] sm:$0xf]
        %v1789 = vpack.c.bf16 %v561, %v559
        %v1790 = vpack.c.bf16 %v562, %v560
        %v1791 = vpack.c.bf16 %v565, %v563
        %v1792 = vpack.c.bf16 %v566, %v564
        %v1793 = vld [vmem:[#allocation11] sm:$0xf]
        %v1794 = vld [vmem:[#allocation11 + $0x4] sm:$0xf]
        %v1795 = vld [vmem:[#allocation11 + $0x8] sm:$0xf]
        %v1796 = vld [vmem:[#allocation11 + $0xc] sm:$0xf]
        %v1797 = vpack.c.bf16 %v1779, %v1777
        %v1798 = vpack.c.bf16 %v1780, %v1778
        %v1799 = vpack.c.bf16 %v1783, %v1781
        %v1800 = vpack.c.bf16 %v1784, %v1782
        %v1805 = vunpack.c.l.b16 %v1793
        %v1806 = vunpack.c.l.b16 %v1794
        %v1807 = vunpack.c.l.b16 %v1795
        %v1808 = vunpack.c.l.b16 %v1796
        %v1809 = vpack.c.b16 %v1806, %v1805
        %v1810 = vpack.c.b16 %v1808, %v1807
        %v1812 = vsel %vm1366, %v1809, 0
        %v1815 = vsel %vm1366, %v1810, 0
        %1817 = vmatprep.subr.bf16.mxu0 0
        %1818 = vmatpush1.bf16.msra.mxu0 0
        %1819 = vmatprep.subr.bf16.mxu0 0
        %1820 = vmatpush1.bf16.msra.mxu0 0
        %1821 = vmatprep.subr.bf16.mxu0 0
        %1822 = vmatpush1.bf16.msra.mxu0 0
        %1823 = vmatprep.subr.bf16.mxu0 0
        %1824 = vmatpush1.bf16.msra.mxu0 0
        %1825 = vmatprep.subr.bf16.mxu0 0
        %1826 = vmatpush1.bf16.msra.mxu0 0
        %1827 = vmatprep.subr.bf16.mxu0 0
        %1828 = vmatpush1.bf16.msra.mxu0 0
        %1829 = vmatprep.subr.bf16.mxu0 %v1800
        %1830 = vmatpush1.bf16.msra.mxu0 %v1799
        %1831 = vmatprep.subr.bf16.mxu0 %v1798
        %1832 = vmatpush1.bf16.msra.mxu0 %v1797
        %1833 = vmatprep.subr.bf16.mxu0 0
        %1834 = vmatpush2.bf16.msra.mxu0 0
        %1835 = vmatprep.subr.bf16.mxu0 0
        %1836 = vmatpush2.bf16.msra.mxu0 0
        %1837 = vmatprep.subr.bf16.mxu0 0
        %1838 = vmatpush2.bf16.msra.mxu0 0
        %1839 = vmatprep.subr.bf16.mxu0 0
        %1840 = vmatpush2.bf16.msra.mxu0 0
        %1841 = vmatprep.subr.bf16.mxu0 0
        %1842 = vmatpush2.bf16.msra.mxu0 0
        %1843 = vmatprep.subr.bf16.mxu0 0
        %1844 = vmatpush2.bf16.msra.mxu0 0
        %1845 = vmatprep.subr.bf16.mxu0 0
        %1846 = vmatpush2.bf16.msra.mxu0 0
        %1847 = vmatprep.subr.bf16.mxu0 0
        %1848 = vmatpush2.bf16.msra.mxu0 0
        %1849 = vmatprep.mubr.bf16.mxu0 0
        %1850 = vmatmul.mubr.bf16.gmra.mxu0 %v1812
        %v1851 = vpop.f32.mrf.mxu0
        %v1852 = vadd.f32 0.0, %v1851
        %v1853 = vpop.f32.mrf.mxu0
        %v1854 = vadd.f32 0.0, %v1853
        %v1855 = vpop.f32.mrf.mxu0
        %v1856 = vadd.f32 0.0, %v1855
        %v1857 = vpop.f32.mrf.mxu0
        %v1858 = vadd.f32 0.0, %v1857
        %1859 = vmatprep.mubr.bf16.mxu0 0
        %1860 = vmatmul.mubr.bf16.gmra.mxu0 %v1815
        %v1861 = vpop.f32.mrf.mxu0
        %v1862 = vadd.f32 0.0, %v1861
        %v1863 = vpop.f32.mrf.mxu0
        %v1864 = vadd.f32 0.0, %v1863
        %v1865 = vpop.f32.mrf.mxu0
        %v1866 = vadd.f32 0.0, %v1865
        %v1867 = vpop.f32.mrf.mxu0
        %v1868 = vadd.f32 0.0, %v1867
        %1869 = vdwg.mxu0
        %v1874 = vunpack.c.l.b16 %v1785
        %v1875 = vunpack.c.l.b16 %v1786
        %v1876 = vunpack.c.l.b16 %v1787
        %v1877 = vunpack.c.l.b16 %v1788
        %v1878 = vpack.c.b16 %v1875, %v1874
        %v1879 = vpack.c.b16 %v1877, %v1876
        %v1881 = vsel %vm1366, %v1878, 0
        %v1884 = vsel %vm1366, %v1879, 0
        %1886 = vmatprep.subr.bf16.mxu0 0
        %1887 = vmatpush1.bf16.msra.mxu0 0
        %1888 = vmatprep.subr.bf16.mxu0 0
        %1889 = vmatpush1.bf16.msra.mxu0 0
        %1890 = vmatprep.subr.bf16.mxu0 0
        %1891 = vmatpush1.bf16.msra.mxu0 0
        %1892 = vmatprep.subr.bf16.mxu0 0
        %1893 = vmatpush1.bf16.msra.mxu0 0
        %1894 = vmatprep.subr.bf16.mxu0 0
        %1895 = vmatpush1.bf16.msra.mxu0 0
        %1896 = vmatprep.subr.bf16.mxu0 0
        %1897 = vmatpush1.bf16.msra.mxu0 0
        %1898 = vmatprep.subr.bf16.mxu0 %v1792
        %1899 = vmatpush1.bf16.msra.mxu0 %v1791
        %1900 = vmatprep.subr.bf16.mxu0 %v1790
        %1901 = vmatpush1.bf16.msra.mxu0 %v1789
        %1902 = vmatprep.subr.bf16.mxu0 0
        %1903 = vmatpush2.bf16.msra.mxu0 0
        %1904 = vmatprep.subr.bf16.mxu0 0
        %1905 = vmatpush2.bf16.msra.mxu0 0
        %1906 = vmatprep.subr.bf16.mxu0 0
        %1907 = vmatpush2.bf16.msra.mxu0 0
        %1908 = vmatprep.subr.bf16.mxu0 0
        %1909 = vmatpush2.bf16.msra.mxu0 0
        %1910 = vmatprep.subr.bf16.mxu0 0
        %1911 = vmatpush2.bf16.msra.mxu0 0
        %1912 = vmatprep.subr.bf16.mxu0 0
        %1913 = vmatpush2.bf16.msra.mxu0 0
        %1914 = vmatprep.subr.bf16.mxu0 0
        %1915 = vmatpush2.bf16.msra.mxu0 0
        %1916 = vmatprep.subr.bf16.mxu0 0
        %1917 = vmatpush2.bf16.msra.mxu0 0
        %1918 = vmatprep.mubr.bf16.mxu0 0
        %1919 = vmatmul.mubr.bf16.gmra.mxu0 %v1881
        %v1920 = vpop.f32.mrf.mxu0
        %v1921 = vadd.f32 %v1852, %v1920
        %v1922 = vpop.f32.mrf.mxu0
        %v1923 = vadd.f32 %v1854, %v1922
        %v1924 = vpop.f32.mrf.mxu0
        %v1925 = vadd.f32 %v1856, %v1924
        %v1926 = vpop.f32.mrf.mxu0
        %v1927 = vadd.f32 %v1858, %v1926
        %1928 = vmatprep.mubr.bf16.mxu0 0
        %1929 = vmatmul.mubr.bf16.gmra.mxu0 %v1884
        %v1930 = vpop.f32.mrf.mxu0
        %v1931 = vadd.f32 %v1862, %v1930
        %v1932 = vpop.f32.mrf.mxu0
        %v1933 = vadd.f32 %v1864, %v1932
        %v1934 = vpop.f32.mrf.mxu0
        %v1935 = vadd.f32 %v1866, %v1934
        %v1936 = vpop.f32.mrf.mxu0
        %v1937 = vadd.f32 %v1868, %v1936
        %1938 = vdwg.mxu0
        %v1939 = vld [vmem:[%s12] sm:$0xff]
        %v1940 = vld [vmem:[%s12 + $0x8] sm:$0xff]
        %v1941 = vld [vmem:[%s12 + $0x10] sm:$0xff]
        %v1942 = vld [vmem:[%s12 + $0x18] sm:$0xff]
        %1944 = vset.pattern.permute.xlu0 0
        %1945 = vperm.xlu0 %1944, %v1939
        %v1946 = vpop.permute.xlu0 %1945
        %1949 = vset.pattern.permute.xlu0 0
        %1950 = vperm.xlu0 %1949, %v1940
        %v1951 = vpop.permute.xlu0 %1950
        %1954 = vset.pattern.permute.xlu0 0
        %1955 = vperm.xlu0 %1954, %v1941
        %v1956 = vpop.permute.xlu0 %1955
        %1959 = vset.pattern.permute.xlu0 0
        %1960 = vperm.xlu0 %1959, %v1942
        %v1961 = vpop.permute.xlu0 %1960
        %v1963 = vadd.f32 %v1921, %v1946
        %v1964 = vadd.f32 %v1923, %v1946
        %v1965 = vadd.f32 %v1925, %v1951
        %v1966 = vadd.f32 %v1927, %v1951
        %v1967 = vadd.f32 %v1931, %v1956
        %v1968 = vadd.f32 %v1933, %v1956
        %v1969 = vadd.f32 %v1935, %v1961
        %v1970 = vadd.f32 %v1937, %v1961
        %1971 = vst [vmem:[%s544] sm:$0xff] %v1963
        %1972 = vst [vmem:[%s544 + $0x8] sm:$0xff] %v1964
        %1973 = vst [vmem:[%s544 + $0x10] sm:$0xff] %v1965
        %1974 = vst [vmem:[%s544 + $0x18] sm:$0xff] %v1966
        %1975 = vst [vmem:[%s544 + $0x20] sm:$0xff] %v1967
        %1976 = vst [vmem:[%s544 + $0x28] sm:$0xff] %v1968
        %1977 = vst [vmem:[%s544 + $0x30] sm:$0xff] %v1969
        %1978 = vst [vmem:[%s544 + $0x38] sm:$0xff] %v1970
        %s1979 = sand.u32 %s324, 1
        %s1980 = scalar_lea.sflag [#allocation4], %s1979
        %s1981 = sand.u32 %s324, 1
        %s1982 = smul.addr %s1981, 64
        %s1983 = scalar_lea.vmem [#allocation13], %s1982
        // Predicated region
        $region97: #{tpu_custom_call.1} parent=71 // pred_check
          %p1984 = pneg %p334
        $region98: #{tpu_custom_call.1} parent=71 // pred_check_branch
          %1986 = sbr.rel (%p1984) target = $region100
        $region99: #{tpu_custom_call.1} parent=71 // pred_region
          %s1988 = ssub.s32 1024, 1024
          %1989 = vsyncadd %s1980, %s1988
          %s1990 = smul.addr %s33, 8
          %s1991 = smul.addr %s1990, 128
          %s1992 = scalar_lea.hbm %s13, %s1991
          %s1993 = sshll.u32 %s1983, 4
          %s1994 = int_to_ptr.vmem [resolvable:$true] %s1993
          %1999 = dma.vmem_to_hbm [thread:$0]  %s1994, 1024, %s1992, %s1980, 256, 256, 16
        $region100: #{tpu_custom_call.1} parent=71 // pred_fallthru
          _
      $region72: #{tpu_custom_call.1} parent=5 // pred_fallthru
        _
      %p2000 = scmp.le.s32.totalorder 2, %s28
      // Predicated region
      $region101: #{tpu_custom_call.1} parent=5 // pred_check
        %p2001 = pneg %p2000
      $region102: #{tpu_custom_call.1} parent=5 // pred_check_branch
        %2003 = sbr.rel (%p2001) target = $region104
      $region103: #{tpu_custom_call.1} parent=5 // pred_region
        %s2004 = ssub.s32 %s28, 2
        // Predicated region
        $region105: #{tpu_custom_call.1} parent=103 // pred_check
          %p2005 = pneg %p340
        $region106: #{tpu_custom_call.1} parent=103 // pred_check_branch
          %2007 = sbr.rel (%p2005) target = $region108
        $region107: #{tpu_custom_call.1} parent=103 // pred_region
          %s2008 = sand.u32 %s325, 1
          %s2009 = scalar_lea.sflag [#allocation4], %s2008
          %s2010 = sand.u32 %s325, 1
          %s2011 = smul.addr %s2010, 64
          %s2012 = scalar_lea.vmem [#allocation13], %s2011
          %2013 = dma.done %s2009, 1024
        $region108: #{tpu_custom_call.1} parent=103 // pred_fallthru
          _
      $region104: #{tpu_custom_call.1} parent=5 // pred_fallthru
        _
    $region6: #{tpu_custom_call.1} parent=1 // loop_footer
      %s32 = sadd.s32 1, %s28
    $region7: #{tpu_custom_call.1} parent=1 // loop_footer_branch
      %27 = sbr.rel target = $region3
    $region8: #{tpu_custom_call.1} parent=1 // loop_exit
      _
    %2014 = vsyncpa [#allocation3], 1
    %s2015 = scalar_lea.sflag [#allocation3], 1
    %2016 = vsyncpa %s2015, 1
    %2017 = vsyncpa [#allocation6], 1
    %2018 = vsyncpa [#allocation9], 1
    %2019 = vsyncpa [#allocation12], 1
    %2020 = vsyncpa [#allocation4], 1
    %s2021 = scalar_lea.sflag [#allocation4], 1
    %2022 = vsyncpa %s2021, 1

</llo_original>
